<compile_context>
chip_gen: v6e
topology: v6e:2x2x1
jax: 0.10.0
libtpu: 0.0.40
codegen_flags: <defaults>
</compile_context>

<pallas_src>
import jax
import jax.numpy as jnp
from jax.experimental import pallas as pl
from jax.experimental.pallas import tpu as pltpu


def _make_fp_kernel(num_layers, has_points1, *, exact_ties, approx_recip):
    """Builds the per-(batch, N-tile) kernel body for a fixed MLP depth."""

    def _recip(x):
        return pl.reciprocal(x, approx=True) if approx_recip else 1.0 / x

    def kernel(*refs):
        out_ref = refs[-2]                 # [1, C_out, Tn]
        xaug = refs[-1]                    # VMEM scratch [C+1, Tn] f32
        i = 0
        x1 = refs[i][0]; i += 1            # [C, Tn]   f32 xyz1 tile (channels-first)
        x2aug = refs[i][0]; i += 1         # [S, C+1]  f32  [-2*x2 | |x2|^2]
        if has_points1:
            p1 = refs[i][0]; i += 1        # [D1, Tn]  f32 (cast to MXU dtype on VPU)
        p2 = refs[i][0]; i += 1            # [D2, S]   MXU dtype
        layer_refs = refs[i:-2]

        S = x2aug.shape[0]
        C = x1.shape[0]
        Tn = x1.shape[1]
        cdt = p2.dtype                     # MXU operand dtype (bf16 perf / f32 exact)

        # --- squared distances d[s, n] via ONE MXU pass (K = C+1) + one add ------
        x1sq = jnp.sum(x1 * x1, axis=0, keepdims=True)                    # [1, Tn]
        xaug[0:C, :] = x1
        xaug[C:C + 1, :] = jnp.ones((1, Tn), jnp.float32)
        d = jnp.dot(x2aug, xaug[...], preferred_element_type=jnp.float32) + x1sq

        # --- 3 nearest neighbours: bounded-live-range unrolled fori_loop ---------
        wnum0 = jnp.zeros((S, Tn), jnp.float32)
        if exact_ties:
            # torch-exact: ascending order with first-occurrence tie-break.
            row = jax.lax.broadcasted_iota(jnp.int32, (S, Tn), 0)

            def body(_k, carry):
                dwork, wnum, norm = carry
                mn = jnp.min(dwork, axis=0, keepdims=True)                # [1, Tn]
                is_min = dwork == mn
                idx = jnp.min(jnp.where(is_min, row, S), axis=0, keepdims=True)
                onehot = row == idx
                recip = _recip(mn + 1e-8)
                return (jnp.where(onehot, jnp.float32(1e30), dwork),
                        wnum + jnp.where(onehot, recip, 0.0),
                        norm + recip)

            _, wnum, norm = jax.lax.fori_loop(
                0, 3, body, (d, wnum0, jnp.zeros((1, Tn), jnp.float32)),
                unroll=True)
        else:
            # Perf path: no iota/idx arrays, one sublane reduction after the loop.
            # Semantics differ from torch only when distances tie bit-exactly.
            def body(_k, carry):
                dwork, wnum = carry
                mn = jnp.min(dwork, axis=0, keepdims=True)
                is_min = dwork == mn
                recip = _recip(mn + 1e-8)
                return (jnp.where(is_min, jnp.float32(1e30), dwork),
                        wnum + jnp.where(is_min, recip, 0.0))

            _, wnum = jax.lax.fori_loop(0, 3, body, (d, wnum0), unroll=True)
            norm = jnp.sum(wnum, axis=0, keepdims=True)

        wmat = wnum * _recip(norm)                                        # cols ~ sum to 1

        # --- inverse-distance interpolation: one MXU matmul -> [D2, Tn] ----------
        interp = jnp.dot(p2, wmat.astype(cdt), preferred_element_type=jnp.float32)

        # --- MLP (1x1 conv folded with eval-mode BN) + ReLU, channels-first ------
        li = 0
        if has_points1:
            w0_p1 = layer_refs[li][...]; li += 1                          # [C1, D1]
        w0_in = layer_refs[li][...]; li += 1                              # [C1, D2]
        b0 = layer_refs[li][...]; li += 1                                 # [C1, 1] f32
        acc = jnp.dot(w0_in, interp.astype(cdt), preferred_element_type=jnp.float32)
        if has_points1:
            acc = acc + jnp.dot(w0_p1, p1.astype(cdt),
                                preferred_element_type=jnp.float32)
        h = jnp.maximum(acc + b0, 0.0)

        for _ in range(1, num_layers):
            w = layer_refs[li][...]; li += 1                              # [C_out, C_in]
            b = layer_refs[li][...]; li += 1                              # [C_out, 1]
            h = jnp.maximum(
                jnp.dot(w, h.astype(cdt), preferred_element_type=jnp.float32) + b,
                0.0)

        out_ref[0] = h.astype(out_ref.dtype)

    return kernel


def _tile_target(S):
    """TILE_N budget so ~5 live [S, TILE_N] f32 NN intermediates stay ~<=1.5 MiB."""
    budget = 3 * 512 * 1024
    t = budget // (5 * 4 * max(int(S), 1))
    return int(max(128, min(1024, (t // 128) * 128)))


def _pick_tile_n(n_pad, S, B):
    """Largest 128-multiple <= target(S) dividing n_pad, keeping >=2 grid blocks."""
    t = min(_tile_target(S), n_pad)
    t = max(128, (t // 128) * 128)
    while n_pad % t:
        t -= 128
    # keep both TensorCores (v7x megacore) busy when possible
    while B * (n_pad // t) < 2 and t > 128:
        cand = max(128, (t // 2 // 128) * 128)
        while n_pad % cand and cand > 128:
            cand -= 128
        if cand == t:
            break
        t = cand
    return t


def pointnet_feature_propagation(xyz1, xyz2, points1, points2, params, *,
                                 tile_n=None, mxu_dtype=jnp.bfloat16,
                                 out_dtype=jnp.float32,
                                 exact_ties=None, approx_recip=None):
    """xyz1:[B,3,N] xyz2:[B,3,S] points1:[B,D1,N]|None points2:[B,D2,S] -> [B,C_out,N].

    params: list of (W[C_in,C_out], conv_bias, bn_gamma, bn_beta, bn_mean, bn_var).
    """
    B, C, N = xyz1.shape
    S = xyz2.shape[2]
    # TODO(synk): S == 1 "repeat" branch not implemented; interpolation path only.
    assert S >= 3, "kernel implements the S>=3 interpolation path"

    cdt = jnp.dtype(mxu_dtype)
    exact_mode = (cdt == jnp.dtype(jnp.float32))
    if exact_ties is None:
        exact_ties = exact_mode          # torch-exact tie-break for validation
    if approx_recip is None:
        approx_recip = not exact_mode    # EUP vrcp in perf mode, exact divide otherwise

    has_p1 = points1 is not None
    D2 = points2.shape[1]
    D1 = points1.shape[1] if has_p1 else 0

    # --- pad N up to a tile multiple; never fall back to an untiled block ------
    if tile_n is None:
        n_pad = ((N + 127) // 128) * 128
        tile_n = _pick_tile_n(n_pad, S, B)
    else:
        assert tile_n % 128 == 0 or tile_n == N, (N, tile_n)
        n_pad = ((N + tile_n - 1) // tile_n) * tile_n
    pad = n_pad - N

    # Only tiny S-sized host-side prep; large N-sized arrays stream untouched
    # (points1 stays in its input dtype and is cast inside the kernel).
    x1 = xyz1.astype(jnp.float32)                                        # [B, C, N]
    if pad:
        x1 = jnp.pad(x1, ((0, 0), (0, 0), (0, pad)))
    x2t = jnp.transpose(xyz2, (0, 2, 1)).astype(jnp.float32)             # [B, S, C]
    x2aug = jnp.concatenate(
        [-2.0 * x2t, jnp.sum(x2t * x2t, axis=-1, keepdims=True)], -1)    # [B, S, C+1]

    inputs = [x1, x2aug]
    in_specs = [
        pl.BlockSpec((1, C, tile_n), lambda b, n: (b, 0, n)),
        pl.BlockSpec((1, S, C + 1), lambda b, n: (b, 0, 0)),
    ]
    if has_p1:
        p1_in = points1 if pad == 0 else jnp.pad(points1, ((0, 0), (0, 0), (0, pad)))
        inputs.append(p1_in)
        in_specs.append(pl.BlockSpec((1, D1, tile_n), lambda b, n: (b, 0, n)))
    inputs.append(points2.astype(cdt))                                   # [B, D2, S]
    in_specs.append(pl.BlockSpec((1, D2, S), lambda b, n: (b, 0, 0)))

    # Fold eval-mode BatchNorm into channels-first 1x1-conv weights / bias.
    folded = []
    for (W, bconv, gamma, beta, mean, var) in params:
        scale = gamma / jnp.sqrt(var + 1e-5)
        W_cf = (W * scale[None, :]).T.astype(cdt)                        # [C_out, C_in]
        b_cf = ((bconv - mean) * scale + beta).reshape(-1, 1).astype(jnp.float32)
        folded.append((W_cf, b_cf))
    num_layers = len(folded)
    c_out = folded[-1][0].shape[0]

    def _const_spec(shape):
        return pl.BlockSpec(tuple(shape), lambda b, n: (0, 0))
    # TODO(synk): pipeline_mode=pl.Buffered(1) on these grid-constant specs would
    #             save ~1 MiB of double-buffer VMEM on v7x; left at the default
    #             buffering for compile compatibility.

    W0, b0 = folded[0]
    assert W0.shape[1] == D1 + D2, "first MLP layer in_channel must equal D1 + D2"
    if has_p1:
        inputs.append(W0[:, :D1]); in_specs.append(_const_spec((W0.shape[0], D1)))
    inputs.append(W0[:, D1:]); in_specs.append(_const_spec((W0.shape[0], D2)))
    inputs.append(b0); in_specs.append(_const_spec(b0.shape))
    for (Wl, bl) in folded[1:]:
        inputs.append(Wl); in_specs.append(_const_spec(Wl.shape))
        inputs.append(bl); in_specs.append(_const_spec(bl.shape))

    # --- VMEM budget derived from the actual per-tile requirement ---------------
    c_dims = [w.shape[0] for w, _ in folded]
    weight_bytes = sum(int(w.size) * w.dtype.itemsize + int(b.size) * 4
                       for w, b in folded)
    stream_bytes = 2 * tile_n * (C * 4
                                 + (D1 * points1.dtype.itemsize if has_p1 else 0)
                                 + c_out * jnp.dtype(out_dtype).itemsize)
    const_bytes = 2 * (S * (C + 1) * 4 + S * D2 * cdt.itemsize + weight_bytes)
    scratch_bytes = (6 * S * tile_n * 4
                     + tile_n * 4 * (D2 + max(c_dims) + C + 2))
    need = stream_bytes + const_bytes + scratch_bytes
    cap = 64 * 1024 * 1024
    try:
        cap = int(getattr(pltpu.get_tpu_info(), "vmem_capacity_bytes", cap))
    except Exception:
        pass
    vmem_limit = int(min(max(int(need * 1.5) + (8 << 20), 16 << 20), (cap * 3) // 4))

    # Advisory cost estimate for XLA scheduling around the custom call.
    dims = [D1 + D2] + c_dims
    mlp_flops = sum(2 * dims[i] * dims[i + 1] for i in range(len(dims) - 1))
    flops = B * n_pad * (2 * S * (C + 1) + 2 * S * D2 + mlp_flops)
    bytes_accessed = (sum(int(a.size) * a.dtype.itemsize for a in inputs)
                      + B * c_out * n_pad * jnp.dtype(out_dtype).itemsize)

    out = pl.pallas_call(
        _make_fp_kernel(num_layers, has_p1,
                        exact_ties=exact_ties, approx_recip=approx_recip),
        grid=(B, n_pad // tile_n),
        in_specs=in_specs,
        out_specs=pl.BlockSpec((1, c_out, tile_n), lambda b, n: (b, 0, n)),
        out_shape=jax.ShapeDtypeStruct((B, c_out, n_pad), jnp.dtype(out_dtype)),
        scratch_shapes=[pltpu.VMEM((C + 1, tile_n), jnp.float32)],
        compiler_params=pltpu.CompilerParams(
            dimension_semantics=("parallel", "parallel"),
            vmem_limit_bytes=vmem_limit),
        cost_estimate=pl.CostEstimate(flops=int(flops), transcendentals=0,
                                      bytes_accessed=int(bytes_accessed)),
    )(*inputs)
    if pad:
        out = out[:, :, :N]
    return out  # [B, C_out, N], channels-first


def _reference(xyz1, xyz2, points1, points2, params):
    """Pure-JAX mirror of the PyTorch forward (eval-mode BN) for validation."""
    hi = jax.lax.Precision.HIGHEST
    x1 = jnp.transpose(xyz1, (0, 2, 1))
    x2 = jnp.transpose(xyz2, (0, 2, 1))
    p2 = jnp.transpose(points2, (0, 2, 1))
    d = (jnp.sum(x1 ** 2, -1)[:, :, None] + jnp.sum(x2 ** 2, -1)[:, None, :]
         - 2.0 * jnp.einsum('bnc,bsc->bns', x1, x2, precision=hi))
    idx = jnp.argsort(d, axis=-1)[:, :, :3]
    dd = jnp.take_along_axis(d, idx, axis=-1)
    recip = 1.0 / (dd + 1e-8)
    w = recip / jnp.sum(recip, -1, keepdims=True)
    gathered = jax.vmap(lambda p, i: p[i])(p2, idx)              # [B, N, 3, D2]
    interp = jnp.sum(gathered * w[..., None], axis=2)
    if points1 is not None:
        h = jnp.concatenate([jnp.transpose(points1, (0, 2, 1)), interp], axis=-1)
    else:
        h = interp
    for (W, bconv, gamma, beta, mean, var) in params:
        scale = gamma / jnp.sqrt(var + 1e-5)
        h = jnp.maximum(
            jnp.einsum('bnc,cd->bnd', h, W * scale[None, :], precision=hi)
            + (bconv * scale + beta - mean * scale), 0.0)
    return jnp.transpose(h, (0, 2, 1))


if __name__ == "__main__":
    key = jax.random.PRNGKey(0)
    B, N, S = 2, 256, 64
    C = 3
    D1, D2 = 16, 32
    mlp = [64, 32]
    in_channel = D1 + D2

    ks = jax.random.split(key, 4 + 6 * len(mlp))
    xyz1 = jax.random.normal(ks[0], (B, C, N), jnp.float32)
    xyz2 = jax.random.normal(ks[1], (B, C, S), jnp.float32)
    points1 = jax.random.normal(ks[2], (B, D1, N), jnp.float32)
    points2 = jax.random.normal(ks[3], (B, D2, S), jnp.float32)

    params = []
    last = in_channel
    ki = 4
    for out_c in mlp:
        W = 0.1 * jax.random.normal(ks[ki], (last, out_c), jnp.float32); ki += 1
        bconv = 0.1 * jax.random.normal(ks[ki], (out_c,), jnp.float32); ki += 1
        gamma = 1.0 + 0.1 * jax.random.normal(ks[ki], (out_c,), jnp.float32); ki += 1
        beta = 0.1 * jax.random.normal(ks[ki], (out_c,), jnp.float32); ki += 1
        mean = 0.1 * jax.random.normal(ks[ki], (out_c,), jnp.float32); ki += 1
        var = jnp.abs(jax.random.normal(ks[ki], (out_c,), jnp.float32)) + 0.5; ki += 1
        params.append((W, bconv, gamma, beta, mean, var))
        last = out_c

    ref = jax.block_until_ready(_reference(xyz1, xyz2, points1, points2, params))

    # 1) Exact path (f32 MXU, torch-exact tie-break, exact divides), TILE_N=128
    #    forced so the N-tiled grid=(B, 2) path is exercised: tight tolerance.
    out_f32 = jax.block_until_ready(pointnet_feature_propagation(
        xyz1, xyz2, points1, points2, params, tile_n=128, mxu_dtype=jnp.float32))
    assert out_f32.shape == (B, mlp[-1], N), out_f32.shape
    assert jnp.allclose(out_f32, ref, atol=1e-4, rtol=1e-4), \
        float(jnp.max(jnp.abs(out_f32 - ref)))

    # 2) Performance path: bf16 MXU operands (f32 accumulate), approx EUP
    #    reciprocals, tie-break-free NN loop, S-aware auto TILE_N, bf16 output.
    out_bf16 = jax.block_until_ready(pointnet_feature_propagation(
        xyz1, xyz2, points1, points2, params,
        mxu_dtype=jnp.bfloat16, out_dtype=jnp.bfloat16))
    assert out_bf16.shape == (B, mlp[-1], N), out_bf16.shape
    assert out_bf16.dtype == jnp.bfloat16
    out_bf16_f32 = out_bf16.astype(jnp.float32)
    assert jnp.allclose(out_bf16_f32, ref, atol=5e-2, rtol=5e-2), \
        float(jnp.max(jnp.abs(out_bf16_f32 - ref)))

    # 3) Padding path: N=200 (not a 128 multiple) is padded to 256 in the wrapper
    #    and the output sliced back; exact mode with tight tolerance validates it.
    Ns = 200
    out_pad = jax.block_until_ready(pointnet_feature_propagation(
        xyz1[:, :, :Ns], xyz2, points1[:, :, :Ns], points2, params,
        mxu_dtype=jnp.float32))
    ref_pad = _reference(xyz1[:, :, :Ns], xyz2, points1[:, :, :Ns], points2, params)
    assert out_pad.shape == (B, mlp[-1], Ns), out_pad.shape
    assert jnp.allclose(out_pad, ref_pad, atol=1e-4, rtol=1e-4), \
        float(jnp.max(jnp.abs(out_pad - ref_pad)))

    print("KERNEL_OK")
</pallas_src>

<mosaic_0001>
module attributes {stable_mosaic.version = 11 : i64} {
  func.func @kernel(%arg0: i32, %arg1: i32, %arg2: memref<1x3x128xf32, #tpu.memory_space<vmem>>, %arg3: memref<1x64x4xf32, #tpu.memory_space<vmem>>, %arg4: memref<1x16x128xf32, #tpu.memory_space<vmem>>, %arg5: memref<1x32x64xf32, #tpu.memory_space<vmem>>, %arg6: memref<64x16xf32, #tpu.memory_space<vmem>>, %arg7: memref<64x32xf32, #tpu.memory_space<vmem>>, %arg8: memref<64x1xf32, #tpu.memory_space<vmem>>, %arg9: memref<32x64xf32, #tpu.memory_space<vmem>>, %arg10: memref<32x1xf32, #tpu.memory_space<vmem>>, %arg11: memref<1x32x128xf32, #tpu.memory_space<vmem>>, %arg12: memref<4x128xf32, #tpu.memory_space<vmem>>) attributes {dimension_semantics = [#tpu.dimension_semantics<parallel>, #tpu.dimension_semantics<parallel>], iteration_bounds = array<i64: 2, 2>, scalar_prefetch = 0 : i64, scratch_operands = 1 : i64, tpu.core_type = #tpu.core_type<tc>, window_params = [{transform_indices = @transform_0, window_bounds = array<i64: 1, 3, 128>}, {transform_indices = @transform_1, window_bounds = array<i64: 1, 64, 4>}, {transform_indices = @transform_2, window_bounds = array<i64: 1, 16, 128>}, {transform_indices = @transform_3, window_bounds = array<i64: 1, 32, 64>}, {pipeline_mode = #tpu.pipeline_mode<synchronous>, transform_indices = @transform_4, window_bounds = array<i64: 64, 16>}, {pipeline_mode = #tpu.pipeline_mode<synchronous>, transform_indices = @transform_5, window_bounds = array<i64: 64, 32>}, {pipeline_mode = #tpu.pipeline_mode<synchronous>, transform_indices = @transform_6, window_bounds = array<i64: 64, 1>}, {pipeline_mode = #tpu.pipeline_mode<synchronous>, transform_indices = @transform_7, window_bounds = array<i64: 32, 64>}, {pipeline_mode = #tpu.pipeline_mode<synchronous>, transform_indices = @transform_8, window_bounds = array<i64: 32, 1>}, {transform_indices = @transform_9, window_bounds = array<i64: 1, 32, 128>}]} {
    %c0 = arith.constant 0 : index
    %c0_0 = arith.constant 0 : index
    %c0_1 = arith.constant 0 : index
    %0 = vector.load %arg2[%c0, %c0_0, %c0_1] : memref<1x3x128xf32, #tpu.memory_space<vmem>>, vector<1x3x128xf32>
    %1 = vector.shape_cast %0 : vector<1x3x128xf32> to vector<3x128xf32>
    %c0_2 = arith.constant 0 : index
    %c0_3 = arith.constant 0 : index
    %c0_4 = arith.constant 0 : index
    %2 = vector.load %arg3[%c0_2, %c0_3, %c0_4] : memref<1x64x4xf32, #tpu.memory_space<vmem>>, vector<1x64x4xf32>
    %3 = vector.shape_cast %2 : vector<1x64x4xf32> to vector<64x4xf32>
    %c0_5 = arith.constant 0 : index
    %c0_6 = arith.constant 0 : index
    %c0_7 = arith.constant 0 : index
    %4 = vector.load %arg4[%c0_5, %c0_6, %c0_7] : memref<1x16x128xf32, #tpu.memory_space<vmem>>, vector<1x16x128xf32>
    %5 = vector.shape_cast %4 : vector<1x16x128xf32> to vector<16x128xf32>
    %c0_8 = arith.constant 0 : index
    %c0_9 = arith.constant 0 : index
    %c0_10 = arith.constant 0 : index
    %6 = vector.load %arg5[%c0_8, %c0_9, %c0_10] : memref<1x32x64xf32, #tpu.memory_space<vmem>>, vector<1x32x64xf32>
    %7 = vector.shape_cast %6 : vector<1x32x64xf32> to vector<32x64xf32>
    %8 = arith.mulf %1, %1 : vector<3x128xf32>
    %cst = arith.constant dense<0.000000e+00> : vector<128xf32>
    %9 = vector.multi_reduction <add>, %8, %cst [0] : vector<3x128xf32> to vector<128xf32>
    %10 = vector.shape_cast %9 : vector<128xf32> to vector<1x128xf32>
    %c0_11 = arith.constant 0 : index
    %c0_12 = arith.constant 0 : index
    %11 = vector.load %arg12[%c0_11, %c0_12] : memref<4x128xf32, #tpu.memory_space<vmem>>, vector<3x128xf32>
    tpu.vector_store %arg12[%c0_11, %c0_12], %1 {strides = array<i32>} : memref<4x128xf32, #tpu.memory_space<vmem>>, vector<3x128xf32>,
    %cst_13 = arith.constant 1.000000e+00 : f32
    %12 = vector.broadcast %cst_13 : f32 to vector<1x128xf32>
    %c3 = arith.constant 3 : index
    %c0_14 = arith.constant 0 : index
    %13 = vector.load %arg12[%c3, %c0_14] : memref<4x128xf32, #tpu.memory_space<vmem>>, vector<1x128xf32>
    tpu.vector_store %arg12[%c3, %c0_14], %12 {strides = array<i32>} : memref<4x128xf32, #tpu.memory_space<vmem>>, vector<1x128xf32>,
    %c0_15 = arith.constant 0 : index
    %c0_16 = arith.constant 0 : index
    %14 = vector.load %arg12[%c0_15, %c0_16] : memref<4x128xf32, #tpu.memory_space<vmem>>, vector<4x128xf32>
    %cst_17 = arith.constant dense<0.000000e+00> : vector<64x128xf32>
    %15 = tpu.matmul %3, %14, %cst_17 {dimension_numbers = #tpu.dot_dimension_numbers<[1], [0], [0], [1], [0, 0, 1, 1], [], []>} : vector<64x4xf32>, vector<4x128xf32>, vector<64x128xf32> -> vector<64x128xf32>
    %16 = vector.broadcast %10 : vector<1x128xf32> to vector<64x128xf32>
    %17 = arith.addf %15, %16 : vector<64x128xf32>
    %cst_18 = arith.constant 0.000000e+00 : f32
    %18 = vector.broadcast %cst_18 : f32 to vector<64x128xf32>
    %19 = tpu.iota {dimensions = array<i32: 0>} : vector<64x128xi32>
    %cst_19 = arith.constant 0.000000e+00 : f32
    %20 = vector.broadcast %cst_19 : f32 to vector<1x128xf32>
    %c0_i32 = arith.constant 0 : i32
    %cst_20 = arith.constant dense<0x7F800000> : vector<128xf32>
    %21 = vector.multi_reduction <minimumf>, %17, %cst_20 [0] : vector<64x128xf32> to vector<128xf32>
    %22 = vector.shape_cast %21 : vector<128xf32> to vector<1x128xf32>
    %23 = vector.broadcast %22 : vector<1x128xf32> to vector<64x128xf32>
    %24 = arith.cmpf oeq, %17, %23 : vector<64x128xf32>
    %c64_i32 = arith.constant 64 : i32
    %25 = vector.broadcast %c64_i32 : i32 to vector<64x128xi32>
    %26 = arith.select %24, %19, %25 : vector<64x128xi1>, vector<64x128xi32>
    %cst_21 = arith.constant dense<2147483647> : vector<128xi32>
    %27 = vector.multi_reduction <minsi>, %26, %cst_21 [0] : vector<64x128xi32> to vector<128xi32>
    %28 = vector.shape_cast %27 : vector<128xi32> to vector<1x128xi32>
    %29 = vector.broadcast %28 : vector<1x128xi32> to vector<64x128xi32>
    %30 = arith.cmpi eq, %19, %29 : vector<64x128xi32>
    %cst_22 = arith.constant 9.99999993E-9 : f32
    %31 = vector.broadcast %cst_22 : f32 to vector<1x128xf32>
    %32 = arith.addf %22, %31 : vector<1x128xf32>
    %cst_23 = arith.constant 1.000000e+00 : f32
    %33 = vector.broadcast %cst_23 : f32 to vector<1x128xf32>
    %34 = arith.divf %33, %32 : vector<1x128xf32>
    %cst_24 = arith.constant 1.000000e+30 : f32
    %35 = vector.broadcast %cst_24 : f32 to vector<64x128xf32>
    %36 = arith.select %30, %35, %17 : vector<64x128xi1>, vector<64x128xf32>
    %cst_25 = arith.constant 0.000000e+00 : f32
    %37 = vector.shape_cast %34 : vector<1x128xf32> to vector<1x128xf32>
    %38 = vector.broadcast %37 : vector<1x128xf32> to vector<64x128xf32>
    %39 = vector.broadcast %cst_25 : f32 to vector<64x128xf32>
    %40 = arith.select %30, %38, %39 : vector<64x128xi1>, vector<64x128xf32>
    %41 = arith.addf %18, %40 : vector<64x128xf32>
    %42 = arith.addf %20, %34 : vector<1x128xf32>
    %c1_i32 = arith.constant 1 : i32
    %cst_26 = arith.constant dense<0x7F800000> : vector<128xf32>
    %43 = vector.multi_reduction <minimumf>, %36, %cst_26 [0] : vector<64x128xf32> to vector<128xf32>
    %44 = vector.shape_cast %43 : vector<128xf32> to vector<1x128xf32>
    %45 = vector.broadcast %44 : vector<1x128xf32> to vector<64x128xf32>
    %46 = arith.cmpf oeq, %36, %45 : vector<64x128xf32>
    %c64_i32_27 = arith.constant 64 : i32
    %47 = vector.broadcast %c64_i32_27 : i32 to vector<64x128xi32>
    %48 = arith.select %46, %19, %47 : vector<64x128xi1>, vector<64x128xi32>
    %cst_28 = arith.constant dense<2147483647> : vector<128xi32>
    %49 = vector.multi_reduction <minsi>, %48, %cst_28 [0] : vector<64x128xi32> to vector<128xi32>
    %50 = vector.shape_cast %49 : vector<128xi32> to vector<1x128xi32>
    %51 = vector.broadcast %50 : vector<1x128xi32> to vector<64x128xi32>
    %52 = arith.cmpi eq, %19, %51 : vector<64x128xi32>
    %cst_29 = arith.constant 9.99999993E-9 : f32
    %53 = vector.broadcast %cst_29 : f32 to vector<1x128xf32>
    %54 = arith.addf %44, %53 : vector<1x128xf32>
    %cst_30 = arith.constant 1.000000e+00 : f32
    %55 = vector.broadcast %cst_30 : f32 to vector<1x128xf32>
    %56 = arith.divf %55, %54 : vector<1x128xf32>
    %cst_31 = arith.constant 1.000000e+30 : f32
    %57 = vector.broadcast %cst_31 : f32 to vector<64x128xf32>
    %58 = arith.select %52, %57, %36 : vector<64x128xi1>, vector<64x128xf32>
    %cst_32 = arith.constant 0.000000e+00 : f32
    %59 = vector.shape_cast %56 : vector<1x128xf32> to vector<1x128xf32>
    %60 = vector.broadcast %59 : vector<1x128xf32> to vector<64x128xf32>
    %61 = vector.broadcast %cst_32 : f32 to vector<64x128xf32>
    %62 = arith.select %52, %60, %61 : vector<64x128xi1>, vector<64x128xf32>
    %63 = arith.addf %41, %62 : vector<64x128xf32>
    %64 = arith.addf %42, %56 : vector<1x128xf32>
    %c2_i32 = arith.constant 2 : i32
    %cst_33 = arith.constant dense<0x7F800000> : vector<128xf32>
    %65 = vector.multi_reduction <minimumf>, %58, %cst_33 [0] : vector<64x128xf32> to vector<128xf32>
    %66 = vector.shape_cast %65 : vector<128xf32> to vector<1x128xf32>
    %67 = vector.broadcast %66 : vector<1x128xf32> to vector<64x128xf32>
    %68 = arith.cmpf oeq, %58, %67 : vector<64x128xf32>
    %c64_i32_34 = arith.constant 64 : i32
    %69 = vector.broadcast %c64_i32_34 : i32 to vector<64x128xi32>
    %70 = arith.select %68, %19, %69 : vector<64x128xi1>, vector<64x128xi32>
    %cst_35 = arith.constant dense<2147483647> : vector<128xi32>
    %71 = vector.multi_reduction <minsi>, %70, %cst_35 [0] : vector<64x128xi32> to vector<128xi32>
    %72 = vector.shape_cast %71 : vector<128xi32> to vector<1x128xi32>
    %73 = vector.broadcast %72 : vector<1x128xi32> to vector<64x128xi32>
    %74 = arith.cmpi eq, %19, %73 : vector<64x128xi32>
    %cst_36 = arith.constant 9.99999993E-9 : f32
    %75 = vector.broadcast %cst_36 : f32 to vector<1x128xf32>
    %76 = arith.addf %66, %75 : vector<1x128xf32>
    %cst_37 = arith.constant 1.000000e+00 : f32
    %77 = vector.broadcast %cst_37 : f32 to vector<1x128xf32>
    %78 = arith.divf %77, %76 : vector<1x128xf32>
    %cst_38 = arith.constant 1.000000e+30 : f32
    %79 = vector.broadcast %cst_38 : f32 to vector<64x128xf32>
    %80 = arith.select %74, %79, %58 : vector<64x128xi1>, vector<64x128xf32>
    %cst_39 = arith.constant 0.000000e+00 : f32
    %81 = vector.shape_cast %78 : vector<1x128xf32> to vector<1x128xf32>
    %82 = vector.broadcast %81 : vector<1x128xf32> to vector<64x128xf32>
    %83 = vector.broadcast %cst_39 : f32 to vector<64x128xf32>
    %84 = arith.select %74, %82, %83 : vector<64x128xi1>, vector<64x128xf32>
    %85 = arith.addf %63, %84 : vector<64x128xf32>
    %86 = arith.addf %64, %78 : vector<1x128xf32>
    %cst_40 = arith.constant 1.000000e+00 : f32
    %87 = vector.broadcast %cst_40 : f32 to vector<1x128xf32>
    %88 = arith.divf %87, %86 : vector<1x128xf32>
    %89 = vector.broadcast %88 : vector<1x128xf32> to vector<64x128xf32>
    %90 = arith.mulf %85, %89 : vector<64x128xf32>
    %cst_41 = arith.constant dense<0.000000e+00> : vector<32x128xf32>
    %91 = tpu.matmul %7, %90, %cst_41 {dimension_numbers = #tpu.dot_dimension_numbers<[1], [0], [0], [1], [0, 0, 1, 1], [], []>} : vector<32x64xf32>, vector<64x128xf32>, vector<32x128xf32> -> vector<32x128xf32>
    %c0_42 = arith.constant 0 : index
    %c0_43 = arith.constant 0 : index
    %92 = vector.load %arg6[%c0_42, %c0_43] : memref<64x16xf32, #tpu.memory_space<vmem>>, vector<64x16xf32>
    %c0_44 = arith.constant 0 : index
    %c0_45 = arith.constant 0 : index
    %93 = vector.load %arg7[%c0_44, %c0_45] : memref<64x32xf32, #tpu.memory_space<vmem>>, vector<64x32xf32>
    %c0_46 = arith.constant 0 : index
    %c0_47 = arith.constant 0 : index
    %94 = vector.load %arg8[%c0_46, %c0_47] : memref<64x1xf32, #tpu.memory_space<vmem>>, vector<64x1xf32>
    %cst_48 = arith.constant dense<0.000000e+00> : vector<64x128xf32>
    %95 = tpu.matmul %93, %91, %cst_48 {dimension_numbers = #tpu.dot_dimension_numbers<[1], [0], [0], [1], [0, 0, 1, 1], [], []>} : vector<64x32xf32>, vector<32x128xf32>, vector<64x128xf32> -> vector<64x128xf32>
    %cst_49 = arith.constant dense<0.000000e+00> : vector<64x128xf32>
    %96 = tpu.matmul %92, %5, %cst_49 {dimension_numbers = #tpu.dot_dimension_numbers<[1], [0], [0], [1], [0, 0, 1, 1], [], []>} : vector<64x16xf32>, vector<16x128xf32>, vector<64x128xf32> -> vector<64x128xf32>
    %97 = arith.addf %95, %96 : vector<64x128xf32>
    %98 = vector.broadcast %94 : vector<64x1xf32> to vector<64x128xf32>
    %99 = arith.addf %97, %98 : vector<64x128xf32>
    %cst_50 = arith.constant 0.000000e+00 : f32
    %100 = vector.broadcast %cst_50 : f32 to vector<64x128xf32>
    %101 = arith.maximumf %99, %100 : vector<64x128xf32>
    %c0_51 = arith.constant 0 : index
    %c0_52 = arith.constant 0 : index
    %102 = vector.load %arg9[%c0_51, %c0_52] : memref<32x64xf32, #tpu.memory_space<vmem>>, vector<32x64xf32>
    %c0_53 = arith.constant 0 : index
    %c0_54 = arith.constant 0 : index
    %103 = vector.load %arg10[%c0_53, %c0_54] : memref<32x1xf32, #tpu.memory_space<vmem>>, vector<32x1xf32>
    %cst_55 = arith.constant dense<0.000000e+00> : vector<32x128xf32>
    %104 = tpu.matmul %102, %101, %cst_55 {dimension_numbers = #tpu.dot_dimension_numbers<[1], [0], [0], [1], [0, 0, 1, 1], [], []>} : vector<32x64xf32>, vector<64x128xf32>, vector<32x128xf32> -> vector<32x128xf32>
    %105 = vector.broadcast %103 : vector<32x1xf32> to vector<32x128xf32>
    %106 = arith.addf %104, %105 : vector<32x128xf32>
    %cst_56 = arith.constant 0.000000e+00 : f32
    %107 = vector.broadcast %cst_56 : f32 to vector<32x128xf32>
    %108 = arith.maximumf %106, %107 : vector<32x128xf32>
    %c0_57 = arith.constant 0 : index
    %c0_58 = arith.constant 0 : index
    %c0_59 = arith.constant 0 : index
    %109 = vector.load %arg11[%c0_57, %c0_58, %c0_59] : memref<1x32x128xf32, #tpu.memory_space<vmem>>, vector<1x32x128xf32>
    %110 = vector.shape_cast %109 : vector<1x32x128xf32> to vector<32x128xf32>
    %111 = vector.shape_cast %108 : vector<32x128xf32> to vector<1x32x128xf32>
    tpu.vector_store %arg11[%c0_57, %c0_58, %c0_59], %111 {strides = array<i32>} : memref<1x32x128xf32, #tpu.memory_space<vmem>>, vector<1x32x128xf32>,
    return
  }
  func.func @transform_0(%arg0: i32, %arg1: i32) -> (i32, i32, i32) {
    %c0_i32 = arith.constant 0 : i32
    %c0_i32_0 = arith.constant 0 : i32
    return %arg0, %c0_i32, %arg1 : i32, i32, i32
  }
  func.func @transform_1(%arg0: i32, %arg1: i32) -> (i32, i32, i32) {
    %c0_i32 = arith.constant 0 : i32
    %c0_i32_0 = arith.constant 0 : i32
    %c0_i32_1 = arith.constant 0 : i32
    return %arg0, %c0_i32, %c0_i32_0 : i32, i32, i32
  }
  func.func @transform_2(%arg0: i32, %arg1: i32) -> (i32, i32, i32) {
    %c0_i32 = arith.constant 0 : i32
    %c0_i32_0 = arith.constant 0 : i32
    return %arg0, %c0_i32, %arg1 : i32, i32, i32
  }
  func.func @transform_3(%arg0: i32, %arg1: i32) -> (i32, i32, i32) {
    %c0_i32 = arith.constant 0 : i32
    %c0_i32_0 = arith.constant 0 : i32
    %c0_i32_1 = arith.constant 0 : i32
    return %arg0, %c0_i32, %c0_i32_0 : i32, i32, i32
  }
  func.func @transform_4(%arg0: i32, %arg1: i32) -> (i32, i32) {
    %c0_i32 = arith.constant 0 : i32
    %c0_i32_0 = arith.constant 0 : i32
    %c0_i32_1 = arith.constant 0 : i32
    return %c0_i32, %c0_i32_0 : i32, i32
  }
  func.func @transform_5(%arg0: i32, %arg1: i32) -> (i32, i32) {
    %c0_i32 = arith.constant 0 : i32
    %c0_i32_0 = arith.constant 0 : i32
    %c0_i32_1 = arith.constant 0 : i32
    return %c0_i32, %c0_i32_0 : i32, i32
  }
  func.func @transform_6(%arg0: i32, %arg1: i32) -> (i32, i32) {
    %c0_i32 = arith.constant 0 : i32
    %c0_i32_0 = arith.constant 0 : i32
    %c0_i32_1 = arith.constant 0 : i32
    return %c0_i32, %c0_i32_0 : i32, i32
  }
  func.func @transform_7(%arg0: i32, %arg1: i32) -> (i32, i32) {
    %c0_i32 = arith.constant 0 : i32
    %c0_i32_0 = arith.constant 0 : i32
    %c0_i32_1 = arith.constant 0 : i32
    return %c0_i32, %c0_i32_0 : i32, i32
  }
  func.func @transform_8(%arg0: i32, %arg1: i32) -> (i32, i32) {
    %c0_i32 = arith.constant 0 : i32
    %c0_i32_0 = arith.constant 0 : i32
    %c0_i32_1 = arith.constant 0 : i32
    return %c0_i32, %c0_i32_0 : i32, i32
  }
  func.func @transform_9(%arg0: i32, %arg1: i32) -> (i32, i32, i32) {
    %c0_i32 = arith.constant 0 : i32
    %c0_i32_0 = arith.constant 0 : i32
    return %arg0, %c0_i32, %arg1 : i32, i32, i32
  }
}

</mosaic_0001>

<llo_original>
// kernel: tpu_custom_call.1
$region0: #{tpu_custom_call.1}
  #allocation0 [shape = 'u32[]', space=smem, size = 0x4, offset = 0x4, fixed_abs, tag = 'smem constant byte address 0x4 - core index']
  #allocation1 [shape = 'u32[144,128]{1,0:T(1,128)}', space=vmem, size = 0x12000, scoped, tag = 'internal scratch']
  #allocation2 [shape = 'f32[4,128]{1,0:T(4,128)}', space=vmem, size = 0x800, scoped, tag = 'scratch operand']
  %s0 = inlined_call_operand.vmem [shape: f32[2,3,256], index: 0, kind: input, shape index: {}]
  %s1 = inlined_call_operand.vmem [shape: f32[2,64,4], index: 1, kind: input, shape index: {}]
  %s2 = inlined_call_operand.vmem [shape: f32[2,16,256], index: 2, kind: input, shape index: {}]
  %s3 = inlined_call_operand.vmem [shape: f32[2,32,64], index: 3, kind: input, shape index: {}]
  %s4 = inlined_call_operand.vmem [shape: f32[64,16], index: 4, kind: input, shape index: {}]
  %s5 = inlined_call_operand.vmem [shape: f32[64,32], index: 5, kind: input, shape index: {}]
  %s6 = inlined_call_operand.vmem [shape: f32[64,1], index: 6, kind: input, shape index: {}]
  %s7 = inlined_call_operand.vmem [shape: f32[32,64], index: 7, kind: input, shape index: {}]
  %s8 = inlined_call_operand.vmem [shape: f32[32,1], index: 8, kind: input, shape index: {}]
  %s9 = inlined_call_operand.hbm [shape: f32[2,32,256], index: 9, kind: output, shape index: {}]
  %s10 = sld [smem:[#allocation0]]
  $region107: #{tpu_custom_call.1} parent=0
    _
  %s12 = ssub.s32 1, %s10
  %s13 = scalar_select 0, %s12, %s10
  $region1: #{tpu_custom_call.1} parent=0
    #allocation3 [shape = 'u8[16384]{0}', space=vmem, size = 0x4000, scoped, tag = 'input window, operand 2']
    #allocation4 [shape = 'u8[32768]{0}', space=vmem, size = 0x8000, scoped, tag = 'output window, operand 0']
    #allocation5 [shape = 's32[2]{0}', space=sflag, size = 0x8, scoped, tag = 'scoped memory for tpu_custom_call.1']
    %14 = vsyncpa [#allocation5], 0
    %s15 = scalar_lea.sflag [#allocation5], 1
    %16 = vsyncpa %s15, 0
    loop: start=0, step=1, limit=6
    $region2: #{tpu_custom_call.1} parent=1 // loop_pre_header
      _
    $region3: #{tpu_custom_call.1} parent=1 // loop_header
      %s18 = sphi 0, %s22
      %p19 = scmp.ge.s32.totalorder %s18, 6
      %s25 = sphi 0, %s37
      %s26 = sphi 0, %s33
      %s27 = sphi 0, %s25
      %s28 = sphi 0, %s26
      %s29 = sphi 0, %s27
      %s30 = sphi 0, %s28
      %s42 = sphi 0, %s44
      %s45 = sphi 0, %s42
      %s46 = sphi 0, %s45
      %s62 = sphi 0, %s46
      %s68 = sphi 0, %s70
      %s71 = sphi 0, %s68
      %s72 = sphi 0, %s71
      %s88 = sphi 0, %s72
      %s96 = sphi 0, %s98
      %s99 = sphi 0, %s96
      %s100 = sphi 0, %s99
      %s116 = sphi 0, %s100
      %s122 = sphi 0, %s124
      %s125 = sphi 0, %s122
      %s126 = sphi 0, %s125
      %s142 = sphi 0, %s126
      %s146 = sphi 0, %s146
      %s148 = sphi 0, %s146
      %s149 = sphi 0, %s148
      %s163 = sphi 0, %s149
      %s167 = sphi 0, %s167
      %s169 = sphi 0, %s167
      %s170 = sphi 0, %s169
      %s184 = sphi 0, %s170
      %s188 = sphi 0, %s188
      %s190 = sphi 0, %s188
      %s191 = sphi 0, %s190
      %s205 = sphi 0, %s191
      %s209 = sphi 0, %s209
      %s211 = sphi 0, %s209
      %s212 = sphi 0, %s211
      %s226 = sphi 0, %s212
      %s230 = sphi 0, %s230
      %s232 = sphi 0, %s230
      %s233 = sphi 0, %s232
      %s247 = sphi 0, %s233
      %s255 = sphi 0, %s257
      %s258 = sphi 0, %s255
      %s259 = sphi 0, %s258
      %s275 = sphi 0, %s259
    $region4: #{tpu_custom_call.1} parent=1 // loop_header_branch
      %21 = sbr.rel (%p19) target = $region8
    $region5: #{tpu_custom_call.1} parent=1 // loop_body
      %s23 = ssub.s32 %s18, 1
      %s24 = ssub.s32 %s18, 2
      %s31 = sadd.s32 1, %s26
      %p32 = scmp.ge.s32.totalorder %s31, 2
      %s33 = scalar_select %p32, 0, %s31
      %s34 = sadd.s32 1, %s25
      %s35 = scalar_select %p32, %s34, %s25
      %p36 = scmp.ge.s32.totalorder %s35, 2
      %s37 = scalar_select %p36, 0, %s35
      %s38 = ssub.s32 %s25, %s37
      %s39 = ssub.s32 %s26, %s33
      %s40 = sor.u32 %s38, %s39
      %p41 = scmp.eq.s32.totalorder %s40, 0
      %s43 = sadd.s32 %s42, 1
      %s44 = scalar_select %p41, %s42, %s43
      %p47 = pneg %p41
      %p48 = scmp.eq.s32.totalorder %s18, 3
      %p49 = por %p47, %p48
      %p50 = scmp.ne.s32.totalorder %s42, %s45
      %p51 = scmp.eq.s32.totalorder %s18, 0
      %p52 = por %p50, %p51
      %p53 = scmp.ne.s32.totalorder %s42, %s45
      %p54 = scmp.eq.s32.totalorder %s23, 3
      %p55 = por %p53, %p54
      %p56 = scmp.ne.s32.totalorder %s45, %s46
      %p57 = scmp.eq.s32.totalorder %s23, 0
      %p58 = por %p56, %p57
      %p59 = scmp.ne.s32.totalorder %s45, %s46
      %p60 = scmp.eq.s32.totalorder %s24, 3
      %p61 = por %p59, %p60
      %p63 = scmp.ne.s32.totalorder %s46, %s62
      %p64 = scmp.eq.s32.totalorder %s24, 0
      %p65 = por %p63, %p64
      %s66 = ssub.s32 %s25, %s37
      %p67 = scmp.eq.s32.totalorder %s66, 0
      %s69 = sadd.s32 %s68, 1
      %s70 = scalar_select %p67, %s68, %s69
      %p73 = pneg %p67
      %p74 = scmp.eq.s32.totalorder %s18, 3
      %p75 = por %p73, %p74
      %p76 = scmp.ne.s32.totalorder %s68, %s71
      %p77 = scmp.eq.s32.totalorder %s18, 0
      %p78 = por %p76, %p77
      %p79 = scmp.ne.s32.totalorder %s68, %s71
      %p80 = scmp.eq.s32.totalorder %s23, 3
      %p81 = por %p79, %p80
      %p82 = scmp.ne.s32.totalorder %s71, %s72
      %p83 = scmp.eq.s32.totalorder %s23, 0
      %p84 = por %p82, %p83
      %p85 = scmp.ne.s32.totalorder %s71, %s72
      %p86 = scmp.eq.s32.totalorder %s24, 3
      %p87 = por %p85, %p86
      %p89 = scmp.ne.s32.totalorder %s72, %s88
      %p90 = scmp.eq.s32.totalorder %s24, 0
      %p91 = por %p89, %p90
      %s92 = ssub.s32 %s25, %s37
      %s93 = ssub.s32 %s26, %s33
      %s94 = sor.u32 %s92, %s93
      %p95 = scmp.eq.s32.totalorder %s94, 0
      %s97 = sadd.s32 %s96, 1
      %s98 = scalar_select %p95, %s96, %s97
      %p101 = pneg %p95
      %p102 = scmp.eq.s32.totalorder %s18, 3
      %p103 = por %p101, %p102
      %p104 = scmp.ne.s32.totalorder %s96, %s99
      %p105 = scmp.eq.s32.totalorder %s18, 0
      %p106 = por %p104, %p105
      %p107 = scmp.ne.s32.totalorder %s96, %s99
      %p108 = scmp.eq.s32.totalorder %s23, 3
      %p109 = por %p107, %p108
      %p110 = scmp.ne.s32.totalorder %s99, %s100
      %p111 = scmp.eq.s32.totalorder %s23, 0
      %p112 = por %p110, %p111
      %p113 = scmp.ne.s32.totalorder %s99, %s100
      %p114 = scmp.eq.s32.totalorder %s24, 3
      %p115 = por %p113, %p114
      %p117 = scmp.ne.s32.totalorder %s100, %s116
      %p118 = scmp.eq.s32.totalorder %s24, 0
      %p119 = por %p117, %p118
      %s120 = ssub.s32 %s25, %s37
      %p121 = scmp.eq.s32.totalorder %s120, 0
      %s123 = sadd.s32 %s122, 1
      %s124 = scalar_select %p121, %s122, %s123
      %p127 = pneg %p121
      %p128 = scmp.eq.s32.totalorder %s18, 3
      %p129 = por %p127, %p128
      %p130 = scmp.ne.s32.totalorder %s122, %s125
      %p131 = scmp.eq.s32.totalorder %s18, 0
      %p132 = por %p130, %p131
      %p133 = scmp.ne.s32.totalorder %s122, %s125
      %p134 = scmp.eq.s32.totalorder %s23, 3
      %p135 = por %p133, %p134
      %p136 = scmp.ne.s32.totalorder %s125, %s126
      %p137 = scmp.eq.s32.totalorder %s23, 0
      %p138 = por %p136, %p137
      %p139 = scmp.ne.s32.totalorder %s125, %s126
      %p140 = scmp.eq.s32.totalorder %s24, 3
      %p141 = por %p139, %p140
      %p143 = scmp.ne.s32.totalorder %s126, %s142
      %p144 = scmp.eq.s32.totalorder %s24, 0
      %p145 = por %p143, %p144
      %s147 = sadd.s32 %s146, 1
      %p150 = scmp.eq.s32.totalorder %s18, 3
      %p151 = scmp.ne.s32.totalorder %s146, %s148
      %p152 = scmp.eq.s32.totalorder %s18, 0
      %p153 = por %p151, %p152
      %p154 = scmp.ne.s32.totalorder %s146, %s148
      %p155 = scmp.eq.s32.totalorder %s23, 3
      %p156 = por %p154, %p155
      %p157 = scmp.ne.s32.totalorder %s148, %s149
      %p158 = scmp.eq.s32.totalorder %s23, 0
      %p159 = por %p157, %p158
      %p160 = scmp.ne.s32.totalorder %s148, %s149
      %p161 = scmp.eq.s32.totalorder %s24, 3
      %p162 = por %p160, %p161
      %p164 = scmp.ne.s32.totalorder %s149, %s163
      %p165 = scmp.eq.s32.totalorder %s24, 0
      %p166 = por %p164, %p165
      %s168 = sadd.s32 %s167, 1
      %p171 = scmp.eq.s32.totalorder %s18, 3
      %p172 = scmp.ne.s32.totalorder %s167, %s169
      %p173 = scmp.eq.s32.totalorder %s18, 0
      %p174 = por %p172, %p173
      %p175 = scmp.ne.s32.totalorder %s167, %s169
      %p176 = scmp.eq.s32.totalorder %s23, 3
      %p177 = por %p175, %p176
      %p178 = scmp.ne.s32.totalorder %s169, %s170
      %p179 = scmp.eq.s32.totalorder %s23, 0
      %p180 = por %p178, %p179
      %p181 = scmp.ne.s32.totalorder %s169, %s170
      %p182 = scmp.eq.s32.totalorder %s24, 3
      %p183 = por %p181, %p182
      %p185 = scmp.ne.s32.totalorder %s170, %s184
      %p186 = scmp.eq.s32.totalorder %s24, 0
      %p187 = por %p185, %p186
      %s189 = sadd.s32 %s188, 1
      %p192 = scmp.eq.s32.totalorder %s18, 3
      %p193 = scmp.ne.s32.totalorder %s188, %s190
      %p194 = scmp.eq.s32.totalorder %s18, 0
      %p195 = por %p193, %p194
      %p196 = scmp.ne.s32.totalorder %s188, %s190
      %p197 = scmp.eq.s32.totalorder %s23, 3
      %p198 = por %p196, %p197
      %p199 = scmp.ne.s32.totalorder %s190, %s191
      %p200 = scmp.eq.s32.totalorder %s23, 0
      %p201 = por %p199, %p200
      %p202 = scmp.ne.s32.totalorder %s190, %s191
      %p203 = scmp.eq.s32.totalorder %s24, 3
      %p204 = por %p202, %p203
      %p206 = scmp.ne.s32.totalorder %s191, %s205
      %p207 = scmp.eq.s32.totalorder %s24, 0
      %p208 = por %p206, %p207
      %s210 = sadd.s32 %s209, 1
      %p213 = scmp.eq.s32.totalorder %s18, 3
      %p214 = scmp.ne.s32.totalorder %s209, %s211
      %p215 = scmp.eq.s32.totalorder %s18, 0
      %p216 = por %p214, %p215
      %p217 = scmp.ne.s32.totalorder %s209, %s211
      %p218 = scmp.eq.s32.totalorder %s23, 3
      %p219 = por %p217, %p218
      %p220 = scmp.ne.s32.totalorder %s211, %s212
      %p221 = scmp.eq.s32.totalorder %s23, 0
      %p222 = por %p220, %p221
      %p223 = scmp.ne.s32.totalorder %s211, %s212
      %p224 = scmp.eq.s32.totalorder %s24, 3
      %p225 = por %p223, %p224
      %p227 = scmp.ne.s32.totalorder %s212, %s226
      %p228 = scmp.eq.s32.totalorder %s24, 0
      %p229 = por %p227, %p228
      %s231 = sadd.s32 %s230, 1
      %p234 = scmp.eq.s32.totalorder %s18, 3
      %p235 = scmp.ne.s32.totalorder %s230, %s232
      %p236 = scmp.eq.s32.totalorder %s18, 0
      %p237 = por %p235, %p236
      %p238 = scmp.ne.s32.totalorder %s230, %s232
      %p239 = scmp.eq.s32.totalorder %s23, 3
      %p240 = por %p238, %p239
      %p241 = scmp.ne.s32.totalorder %s232, %s233
      %p242 = scmp.eq.s32.totalorder %s23, 0
      %p243 = por %p241, %p242
      %p244 = scmp.ne.s32.totalorder %s232, %s233
      %p245 = scmp.eq.s32.totalorder %s24, 3
      %p246 = por %p244, %p245
      %p248 = scmp.ne.s32.totalorder %s233, %s247
      %p249 = scmp.eq.s32.totalorder %s24, 0
      %p250 = por %p248, %p249
      %s251 = ssub.s32 %s25, %s37
      %s252 = ssub.s32 %s26, %s33
      %s253 = sor.u32 %s251, %s252
      %p254 = scmp.eq.s32.totalorder %s253, 0
      %s256 = sadd.s32 %s255, 1
      %s257 = scalar_select %p254, %s255, %s256
      %p260 = pneg %p254
      %p261 = scmp.eq.s32.totalorder %s18, 3
      %p262 = por %p260, %p261
      %p263 = scmp.ne.s32.totalorder %s255, %s258
      %p264 = scmp.eq.s32.totalorder %s18, 0
      %p265 = por %p263, %p264
      %p266 = scmp.ne.s32.totalorder %s255, %s258
      %p267 = scmp.eq.s32.totalorder %s23, 3
      %p268 = por %p266, %p267
      %p269 = scmp.ne.s32.totalorder %s258, %s259
      %p270 = scmp.eq.s32.totalorder %s23, 0
      %p271 = por %p269, %p270
      %p272 = scmp.ne.s32.totalorder %s258, %s259
      %p273 = scmp.eq.s32.totalorder %s24, 3
      %p274 = por %p272, %p273
      %p276 = scmp.ne.s32.totalorder %s259, %s275
      %p277 = scmp.eq.s32.totalorder %s24, 0
      %p278 = por %p276, %p277
      %p279 = scmp.le.s32.totalorder 1, %s18
      %p280 = scmp.lt.s32.totalorder %s18, 5
      %p281 = pnand %p279, %p280
      %p282 = pneg %p281
      // Predicated region
      $region9: #{tpu_custom_call.1} parent=5 // pred_check
        _
      $region10: #{tpu_custom_call.1} parent=5 // pred_check_branch
        %284 = sbr.rel (%p281) target = $region12
      $region11: #{tpu_custom_call.1} parent=5 // pred_region
        %s285 = ssub.s32 %s18, 1
        // Predicated region
        $region13: #{tpu_custom_call.1} parent=11 // pred_check
          %p286 = pneg %p159
        $region14: #{tpu_custom_call.1} parent=11 // pred_check_branch
          %288 = sbr.rel (%p286) target = $region16
        $region15: #{tpu_custom_call.1} parent=11 // pred_region
          _
        $region16: #{tpu_custom_call.1} parent=11 // pred_fallthru
          _
        // Predicated region
        $region17: #{tpu_custom_call.1} parent=11 // pred_check
          %p289 = pneg %p180
        $region18: #{tpu_custom_call.1} parent=11 // pred_check_branch
          %291 = sbr.rel (%p289) target = $region20
        $region19: #{tpu_custom_call.1} parent=11 // pred_region
          _
        $region20: #{tpu_custom_call.1} parent=11 // pred_fallthru
          _
        // Predicated region
        $region21: #{tpu_custom_call.1} parent=11 // pred_check
          %p292 = pneg %p201
        $region22: #{tpu_custom_call.1} parent=11 // pred_check_branch
          %294 = sbr.rel (%p292) target = $region24
        $region23: #{tpu_custom_call.1} parent=11 // pred_region
          _
        $region24: #{tpu_custom_call.1} parent=11 // pred_fallthru
          _
        // Predicated region
        $region25: #{tpu_custom_call.1} parent=11 // pred_check
          %p295 = pneg %p222
        $region26: #{tpu_custom_call.1} parent=11 // pred_check_branch
          %297 = sbr.rel (%p295) target = $region28
        $region27: #{tpu_custom_call.1} parent=11 // pred_region
          _
        $region28: #{tpu_custom_call.1} parent=11 // pred_fallthru
          _
        // Predicated region
        $region29: #{tpu_custom_call.1} parent=11 // pred_check
          %p298 = pneg %p243
        $region30: #{tpu_custom_call.1} parent=11 // pred_check_branch
          %300 = sbr.rel (%p298) target = $region32
        $region31: #{tpu_custom_call.1} parent=11 // pred_region
          _
        $region32: #{tpu_custom_call.1} parent=11 // pred_fallthru
          _
      $region12: #{tpu_custom_call.1} parent=5 // pred_fallthru
        _
      %p301 = scmp.lt.s32.totalorder %s18, 4
      // Predicated region
      $region33: #{tpu_custom_call.1} parent=5 // pred_check
        %p302 = pneg %p301
      $region34: #{tpu_custom_call.1} parent=5 // pred_check_branch
        %304 = sbr.rel (%p302) target = $region36
      $region35: #{tpu_custom_call.1} parent=5 // pred_region
        // Predicated region
        $region37: #{tpu_custom_call.1} parent=35 // pred_check
          %p305 = pneg %p52
        $region38: #{tpu_custom_call.1} parent=35 // pred_check_branch
          %307 = sbr.rel (%p305) target = $region40
        $region39: #{tpu_custom_call.1} parent=35 // pred_region
          %p308 = scmp.lt.s32.totalorder %s25, 1
          %s309 = scalar_select %p308, %s25, 1
          %p310 = scmp.lt.s32.totalorder %s26, 1
          %s311 = scalar_select %p310, %s26, 1
          %s312 = smul.addr %s309, 2
          %s313 = sadd.s32 %s311, %s312
          %s314 = smul.addr %s313, 4
          %s315 = scalar_lea.vmem %s0, %s314
        $region40: #{tpu_custom_call.1} parent=35 // pred_fallthru
          _
        // Predicated region
        $region41: #{tpu_custom_call.1} parent=35 // pred_check
          %p316 = pneg %p78
        $region42: #{tpu_custom_call.1} parent=35 // pred_check_branch
          %318 = sbr.rel (%p316) target = $region44
        $region43: #{tpu_custom_call.1} parent=35 // pred_region
          %p319 = scmp.lt.s32.totalorder %s25, 1
          %s320 = scalar_select %p319, %s25, 1
          %s321 = smul.addr %s320, 8
          %s322 = smul.addr %s321, 8
          %s323 = scalar_lea.vmem %s1, %s322
        $region44: #{tpu_custom_call.1} parent=35 // pred_fallthru
          _
        // Predicated region
        $region45: #{tpu_custom_call.1} parent=35 // pred_check
          %p324 = pneg %p106
        $region46: #{tpu_custom_call.1} parent=35 // pred_check_branch
          %326 = sbr.rel (%p324) target = $region48
        $region47: #{tpu_custom_call.1} parent=35 // pred_region
          %s327 = sand.u32 %s96, 1
          %s328 = sand.u32 %s96, 1
          %s329 = smul.addr %s328, 16
          %s330 = scalar_lea.vmem [#allocation3], %s329
          %s331 = smul.addr %s25, 4
          %s332 = sadd.s32 %s26, %s331
          %s333 = smul.addr %s332, 8
          %s334 = scalar_lea.vmem %s2, %s333
          // Predicated region
          $region49: #{tpu_custom_call.1} parent=47 // pred_check
            _
          $region50: #{tpu_custom_call.1} parent=47 // pred_check_branch
            %336 = sbr.rel (0) target = $region52
          $region51: #{tpu_custom_call.1} parent=47 // pred_region
            // Predicated region
            $region53: #{tpu_custom_call.1} parent=51 // pred_check
              _
            $region54: #{tpu_custom_call.1} parent=51 // pred_check_branch
              %338 = sbr.rel (0) target = $region56
            $region55: #{tpu_custom_call.1} parent=51 // pred_region
              // Predicated region
              $region68: #{tpu_custom_call.1} parent=55 // pred_check
                _
              $region69: #{tpu_custom_call.1} parent=55 // pred_check_branch
                %356 = sbr.rel (0) target = $region71
              $region70: #{tpu_custom_call.1} parent=55 // pred_region
                loop: start=0, step=1, limit=1
                $region72: #{tpu_custom_call.1} parent=70 // loop_pre_header
                  _
                $region73: #{tpu_custom_call.1} parent=70 // loop_header
                  %s358 = sphi 0, %s362
                  %p359 = scmp.ge.s32.totalorder %s358, 1
                  %s363 = sphi %s334, %s334
                  %s364 = sphi %s330, %s330
                $region74: #{tpu_custom_call.1} parent=70 // loop_header_branch
                  %361 = sbr.rel (%p359) target = $region78
                $region75: #{tpu_custom_call.1} parent=70 // loop_body
                  %v365 = vld [vmem:[%s363] sm:$0xff]
                  %366 = vst [vmem:[%s364] sm:$0xff] %v365
                  %v367 = vld [vmem:[%s363 + $0x10] sm:$0xff]
                  %368 = vst [vmem:[%s364 + $0x8] sm:$0xff] %v367
                $region76: #{tpu_custom_call.1} parent=70 // loop_footer
                  %s362 = sadd.s32 1, %s358
                $region77: #{tpu_custom_call.1} parent=70 // loop_footer_branch
                  %357 = sbr.rel target = $region73
                $region78: #{tpu_custom_call.1} parent=70 // loop_exit
                  _
              $region71: #{tpu_custom_call.1} parent=55 // pred_fallthru
                _
              // Predicated region
              $region79: #{tpu_custom_call.1} parent=55 // pred_check
                _
              $region80: #{tpu_custom_call.1} parent=55 // pred_check_branch
                %370 = sbr.rel target = $region82
              $region81: #{tpu_custom_call.1} parent=55 // pred_region
                _
              $region82: #{tpu_custom_call.1} parent=55 // pred_fallthru
                _
            $region56: #{tpu_custom_call.1} parent=51 // pred_fallthru
              _
            // Predicated region
            $region57: #{tpu_custom_call.1} parent=51 // pred_check
              _
            $region58: #{tpu_custom_call.1} parent=51 // pred_check_branch
              %340 = sbr.rel target = $region60
            $region59: #{tpu_custom_call.1} parent=51 // pred_region
              %s342 = ssub.s32 256, 1
              loop: start=0, step=1, limit=1
              $region61: #{tpu_custom_call.1} parent=59 // loop_pre_header
                _
              $region62: #{tpu_custom_call.1} parent=59 // loop_header
                %s344 = sphi 0, %s348
                %p345 = scmp.ge.s32.totalorder %s344, 1
                %s349 = sphi %s334, %s334
                %s350 = sphi %s330, %s330
              $region63: #{tpu_custom_call.1} parent=59 // loop_header_branch
                %347 = sbr.rel (%p345) target = $region67
              $region64: #{tpu_custom_call.1} parent=59 // loop_body
                %v351 = vld [vmem:[%s349] sm:%s342]
                %352 = vst [vmem:[%s350] sm:%s342] %v351
                %v353 = vld [vmem:[%s349 + $0x10] sm:%s342]
                %354 = vst [vmem:[%s350 + $0x8] sm:%s342] %v353
              $region65: #{tpu_custom_call.1} parent=59 // loop_footer
                %s348 = sadd.s32 1, %s344
              $region66: #{tpu_custom_call.1} parent=59 // loop_footer_branch
                %343 = sbr.rel target = $region62
              $region67: #{tpu_custom_call.1} parent=59 // loop_exit
                _
            $region60: #{tpu_custom_call.1} parent=51 // pred_fallthru
              _
          $region52: #{tpu_custom_call.1} parent=47 // pred_fallthru
            _
          %371 = vnop
        $region48: #{tpu_custom_call.1} parent=35 // pred_fallthru
          _
        // Predicated region
        $region83: #{tpu_custom_call.1} parent=35 // pred_check
          %p372 = pneg %p132
        $region84: #{tpu_custom_call.1} parent=35 // pred_check_branch
          %374 = sbr.rel (%p372) target = $region86
        $region85: #{tpu_custom_call.1} parent=35 // pred_region
          %p375 = scmp.lt.s32.totalorder %s25, 1
          %s376 = scalar_select %p375, %s25, 1
          %s377 = smul.addr %s376, 4
          %s378 = smul.addr %s377, 8
          %s379 = scalar_lea.vmem %s3, %s378
        $region86: #{tpu_custom_call.1} parent=35 // pred_fallthru
          _
      $region36: #{tpu_custom_call.1} parent=5 // pred_fallthru
        _
      %p380 = scmp.le.s32.totalorder 1, %s18
      %p381 = scmp.lt.s32.totalorder %s18, 5
      %p382 = pnand %p380, %p381
      %p383 = pneg %p382
      // Predicated region
      $region87: #{tpu_custom_call.1} parent=5 // pred_check
        _
      $region88: #{tpu_custom_call.1} parent=5 // pred_check_branch
        %385 = sbr.rel (%p382) target = $region90
      $region89: #{tpu_custom_call.1} parent=5 // pred_region
        %s386 = ssub.s32 %s18, 1
        %s387 = sand.u32 %s99, 1
        %s388 = sand.u32 %s99, 1
        %s389 = smul.addr %s388, 16
        %s390 = scalar_lea.vmem [#allocation3], %s389
        // Predicated region
        $region91: #{tpu_custom_call.1} parent=89 // pred_check
          %p391 = pneg %p112
        $region92: #{tpu_custom_call.1} parent=89 // pred_check_branch
          %393 = sbr.rel (%p391) target = $region94
        $region93: #{tpu_custom_call.1} parent=89 // pred_region
          _
        $region94: #{tpu_custom_call.1} parent=89 // pred_fallthru
          _
        %p394 = scmp.lt.s32.totalorder %s27, 1
        %s395 = scalar_select %p394, %s27, 1
        %p396 = scmp.lt.s32.totalorder %s28, 1
        %s397 = scalar_select %p396, %s28, 1
        %s398 = smul.addr %s395, 2
        %s399 = sadd.s32 %s397, %s398
        %s400 = smul.addr %s399, 4
        %s401 = scalar_lea.vmem %s0, %s400
        %p402 = pneg %p58
        %p403 = pneg %p55
        %p404 = scmp.lt.s32.totalorder %s27, 1
        %s405 = scalar_select %p404, %s27, 1
        %s406 = smul.addr %s405, 8
        %s407 = smul.addr %s406, 8
        %s408 = scalar_lea.vmem %s1, %s407
        %p409 = pneg %p84
        %p410 = pneg %p81
        %s411 = sand.u32 %s99, 1
        %s412 = sand.u32 %s99, 1
        %s413 = smul.addr %s412, 16
        %s414 = scalar_lea.vmem [#allocation3], %s413
        %p415 = pneg %p112
        %p416 = pneg %p109
        %p417 = scmp.lt.s32.totalorder %s27, 1
        %s418 = scalar_select %p417, %s27, 1
        %s419 = smul.addr %s418, 4
        %s420 = smul.addr %s419, 8
        %s421 = scalar_lea.vmem %s3, %s420
        %p422 = pneg %p138
        %p423 = pneg %p135
        %p424 = pneg %p159
        %p425 = pneg %p156
        %p426 = pneg %p180
        %p427 = pneg %p177
        %p428 = pneg %p201
        %p429 = pneg %p198
        %p430 = pneg %p222
        %p431 = pneg %p219
        %p432 = pneg %p243
        %p433 = pneg %p240
        %p434 = pneg %p271
        %p435 = pneg %p268
        %s436 = sand.u32 %s258, 1
        %s437 = scalar_lea.sflag [#allocation5], %s436
        %s438 = sand.u32 %s258, 1
        %s439 = smul.addr %s438, 32
        %s440 = scalar_lea.vmem [#allocation4], %s439
        %p441 = scmp.lt.s32.totalorder %s27, 1
        %s442 = scalar_select %p441, %s27, 1
        %p443 = scmp.lt.s32.totalorder %s28, 1
        %s444 = scalar_select %p443, %s28, 1
        %s445 = smul.addr %s442, 2
        %s446 = sadd.s32 %s444, %s445
        %s447 = smul.addr %s446, 4
        %s448 = scalar_lea.vmem %s0, %s447
        %p449 = scmp.lt.s32.totalorder %s27, 1
        %s450 = scalar_select %p449, %s27, 1
        %s451 = smul.addr %s450, 8
        %s452 = smul.addr %s451, 8
        %s453 = scalar_lea.vmem %s1, %s452
        %p454 = scmp.lt.s32.totalorder %s27, 1
        %s455 = scalar_select %p454, %s27, 1
        %s456 = smul.addr %s455, 4
        %s457 = smul.addr %s456, 8
        %s458 = scalar_lea.vmem %s3, %s457
        %v459 = vld [vmem:[%s448] sm:$0x7]
        %v460 = vld [vmem:[%s453] sm:$0xff]
        %v461 = vld [vmem:[%s453 + $0x8] sm:$0xff]
        %v462 = vld [vmem:[%s453 + $0x10] sm:$0xff]
        %v463 = vld [vmem:[%s453 + $0x18] sm:$0xff]
        %v464 = vld [vmem:[%s453 + $0x20] sm:$0xff]
        %v465 = vld [vmem:[%s453 + $0x28] sm:$0xff]
        %v466 = vld [vmem:[%s453 + $0x30] sm:$0xff]
        %v467 = vld [vmem:[%s453 + $0x38] sm:$0xff]
        %v468 = vld [vmem:[%s390] sm:$0xff]
        %v469 = vld [vmem:[%s390 + $0x8] sm:$0xff]
        %v470 = vld [vmem:[%s458] sm:$0xff]
        %v471 = vld [vmem:[%s458 + $0x8] sm:$0xff]
        %v472 = vld [vmem:[%s458 + $0x10] sm:$0xff]
        %v473 = vld [vmem:[%s458 + $0x18] sm:$0xff]
        %v474 = vmul.f32 %v459, %v459
        %vm475 = vcmask 1042432
        %v476 = vsel %vm475, %v474, 0.0
        %v477 = vrot.slane %v476, 4
        %v478 = vadd.f32 %v476, %v477
        %v479 = vrot.slane %v478, 2
        %v480 = vadd.f32 %v478, %v479
        %v481 = vrot.slane %v480, 1
        %v482 = vadd.f32 %v480, %v481
        %483 = vst [vmem:[#allocation2] sm:$0x7] %v459
        %484 = vst [vmem:[#allocation2 + $0x3] sm:$0x1] 1.0
        %v485 = vld [vmem:[#allocation2] sm:$0xf]
        %vm486 = vcmask 31744
        %v488 = vsel %vm486, %v460, 0
        %v491 = vsel %vm486, %v461, 0
        %v494 = vsel %vm486, %v462, 0
        %v497 = vsel %vm486, %v463, 0
        %v500 = vsel %vm486, %v464, 0
        %v503 = vsel %vm486, %v465, 0
        %v506 = vsel %vm486, %v466, 0
        %v509 = vsel %vm486, %v467, 0
        %vm511 = vcmask 1043456
        %v513 = vsel %vm511, %v485, 0
        %515 = vmatprep.subr.mxu0 0.0
        %516 = vmatpush1.msra.mxu0 0.0
        %517 = vmatprep.subr.mxu0 0.0
        %518 = vmatpush1.msra.mxu0 0.0
        %519 = vmatprep.subr.mxu0 0.0
        %520 = vmatpush1.msra.mxu0 0.0
        %521 = vmatprep.subr.mxu0 0.0
        %522 = vmatpush1.msra.mxu0 0.0
        %523 = vmatprep.subr.mxu0 0.0
        %524 = vmatpush1.msra.mxu0 0.0
        %525 = vmatprep.subr.mxu0 0.0
        %526 = vmatpush1.msra.mxu0 0.0
        %527 = vmatprep.subr.mxu0 0.0
        %528 = vmatpush1.msra.mxu0 0.0
        %529 = vmatprep.subr.mxu0 0.0
        %530 = vmatpush1.msra.mxu0 0.0
        %531 = vmatprep.subr.mxu0 0.0
        %532 = vmatpush1.msra.mxu0 0.0
        %533 = vmatprep.subr.mxu0 0.0
        %534 = vmatpush1.msra.mxu0 0.0
        %535 = vmatprep.subr.mxu0 0.0
        %536 = vmatpush1.msra.mxu0 0.0
        %537 = vmatprep.subr.mxu0 0.0
        %538 = vmatpush1.msra.mxu0 0.0
        %539 = vmatprep.subr.mxu0 0.0
        %540 = vmatpush1.msra.mxu0 0.0
        %541 = vmatprep.subr.mxu0 0.0
        %542 = vmatpush1.msra.mxu0 0.0
        %543 = vmatprep.subr.mxu0 0.0
        %544 = vmatpush1.msra.mxu0 0.0
        %545 = vmatprep.subr.mxu0 0.0
        %546 = vmatpush1.msra.mxu0 %v513
        %547 = vmatprep.subr.mxu0 0.0
        %548 = vmatpush2.msra.mxu0 0.0
        %549 = vmatprep.subr.mxu0 0.0
        %550 = vmatpush2.msra.mxu0 0.0
        %551 = vmatprep.subr.mxu0 0.0
        %552 = vmatpush2.msra.mxu0 0.0
        %553 = vmatprep.subr.mxu0 0.0
        %554 = vmatpush2.msra.mxu0 0.0
        %555 = vmatprep.subr.mxu0 0.0
        %556 = vmatpush2.msra.mxu0 0.0
        %557 = vmatprep.subr.mxu0 0.0
        %558 = vmatpush2.msra.mxu0 0.0
        %559 = vmatprep.subr.mxu0 0.0
        %560 = vmatpush2.msra.mxu0 0.0
        %561 = vmatprep.subr.mxu0 0.0
        %562 = vmatpush2.msra.mxu0 0.0
        %563 = vmatprep.subr.mxu0 0.0
        %564 = vmatpush2.msra.mxu0 0.0
        %565 = vmatprep.subr.mxu0 0.0
        %566 = vmatpush2.msra.mxu0 0.0
        %567 = vmatprep.subr.mxu0 0.0
        %568 = vmatpush2.msra.mxu0 0.0
        %569 = vmatprep.subr.mxu0 0.0
        %570 = vmatpush2.msra.mxu0 0.0
        %571 = vmatprep.subr.mxu0 0.0
        %572 = vmatpush2.msra.mxu0 0.0
        %573 = vmatprep.subr.mxu0 0.0
        %574 = vmatpush2.msra.mxu0 0.0
        %575 = vmatprep.subr.mxu0 0.0
        %576 = vmatpush2.msra.mxu0 0.0
        %577 = vmatprep.subr.mxu0 0.0
        %578 = vmatpush2.msra.mxu0 0.0
        %579 = vmatprep.mubr.f32.mxu0 0.0
        %580 = vmatmul.mubr.f32.gmra.mxu0 %v488
        %v581 = vpop.f32.mrf.mxu0
        %v582 = vadd.f32 %v482, %v581
        %v583 = vpop.f32.mrf.mxu0
        %584 = vmatprep.mubr.f32.mxu0 0.0
        %585 = vmatmul.mubr.f32.gmra.mxu0 %v491
        %v586 = vpop.f32.mrf.mxu0
        %v587 = vadd.f32 %v482, %v586
        %v588 = vpop.f32.mrf.mxu0
        %589 = vmatprep.mubr.f32.mxu0 0.0
        %590 = vmatmul.mubr.f32.gmra.mxu0 %v494
        %v591 = vpop.f32.mrf.mxu0
        %v592 = vadd.f32 %v482, %v591
        %v593 = vpop.f32.mrf.mxu0
        %594 = vmatprep.mubr.f32.mxu0 0.0
        %595 = vmatmul.mubr.f32.gmra.mxu0 %v497
        %v596 = vpop.f32.mrf.mxu0
        %v597 = vadd.f32 %v482, %v596
        %v598 = vpop.f32.mrf.mxu0
        %599 = vmatprep.mubr.f32.mxu0 0.0
        %600 = vmatmul.mubr.f32.gmra.mxu0 %v500
        %v601 = vpop.f32.mrf.mxu0
        %v602 = vadd.f32 %v482, %v601
        %v603 = vpop.f32.mrf.mxu0
        %604 = vmatprep.mubr.f32.mxu0 0.0
        %605 = vmatmul.mubr.f32.gmra.mxu0 %v503
        %v606 = vpop.f32.mrf.mxu0
        %v607 = vadd.f32 %v482, %v606
        %v608 = vpop.f32.mrf.mxu0
        %609 = vmatprep.mubr.f32.mxu0 0.0
        %610 = vmatmul.mubr.f32.gmra.mxu0 %v506
        %v611 = vpop.f32.mrf.mxu0
        %v612 = vadd.f32 %v482, %v611
        %v613 = vpop.f32.mrf.mxu0
        %614 = vmatprep.mubr.f32.mxu0 0.0
        %615 = vmatmul.mubr.f32.gmra.mxu0 %v509
        %v616 = vpop.f32.mrf.mxu0
        %v617 = vadd.f32 %v482, %v616
        %v618 = vpop.f32.mrf.mxu0
        %619 = vdwg.mxu0
        %v620 = vlaneseq
        %v621 = vshrl.u32 %v620, 7
        %v622 = vadd.s32 %v621, 8
        %v623 = vadd.s32 %v621, 16
        %v624 = vadd.s32 %v621, 24
        %v625 = vadd.s32 %v621, 32
        %v626 = vadd.s32 %v621, 40
        %v627 = vadd.s32 %v621, 48
        %v628 = vadd.s32 %v621, 56
        %v629 = vmin.f32 %v582, %v602
        %v630 = vmin.f32 %v587, %v607
        %v631 = vmin.f32 %v592, %v612
        %v632 = vmin.f32 %v597, %v617
        %v633 = vmin.f32 %v629, %v630
        %v634 = vmin.f32 %v631, %v632
        %v635 = vmin.f32 %v633, %v634
        %v636 = vrot.slane %v635, 4
        %v637 = vmin.f32 %v635, %v636
        %v638 = vrot.slane %v637, 2
        %v639 = vmin.f32 %v637, %v638
        %v640 = vrot.slane %v639, 1
        %v641 = vmin.f32 %v639, %v640
        %vm642 = vcmp.eq.f32.partialorder %v582, %v641
        %vm643 = vcmp.eq.f32.partialorder %v587, %v641
        %vm644 = vcmp.eq.f32.partialorder %v592, %v641
        %vm645 = vcmp.eq.f32.partialorder %v597, %v641
        %vm646 = vcmp.eq.f32.partialorder %v602, %v641
        %vm647 = vcmp.eq.f32.partialorder %v607, %v641
        %vm648 = vcmp.eq.f32.partialorder %v612, %v641
        %vm649 = vcmp.eq.f32.partialorder %v617, %v641
        %v650 = vsel %vm642, %v621, 64
        %v651 = vsel %vm643, %v622, 64
        %v652 = vsel %vm644, %v623, 64
        %v653 = vsel %vm645, %v624, 64
        %v654 = vsel %vm646, %v625, 64
        %v655 = vsel %vm647, %v626, 64
        %v656 = vsel %vm648, %v627, 64
        %v657 = vsel %vm649, %v628, 64
        %vm658 = vcmp.lt.s32.totalorder %v650, %v654
        %v659 = vsel %vm658, %v650, %v654
        %vm660 = vcmp.lt.s32.totalorder %v651, %v655
        %v661 = vsel %vm660, %v651, %v655
        %vm662 = vcmp.lt.s32.totalorder %v652, %v656
        %v663 = vsel %vm662, %v652, %v656
        %vm664 = vcmp.lt.s32.totalorder %v653, %v657
        %v665 = vsel %vm664, %v653, %v657
        %vm666 = vcmp.lt.s32.totalorder %v659, %v661
        %v667 = vsel %vm666, %v659, %v661
        %vm668 = vcmp.lt.s32.totalorder %v663, %v665
        %v669 = vsel %vm668, %v663, %v665
        %vm670 = vcmp.lt.s32.totalorder %v667, %v669
        %v671 = vsel %vm670, %v667, %v669
        %v672 = vrot.slane %v671, 4
        %vm673 = vcmp.lt.s32.totalorder %v671, %v672
        %v674 = vsel %vm673, %v671, %v672
        %v675 = vrot.slane %v674, 2
        %vm676 = vcmp.lt.s32.totalorder %v674, %v675
        %v677 = vsel %vm676, %v674, %v675
        %v678 = vrot.slane %v677, 1
        %vm679 = vcmp.lt.s32.totalorder %v677, %v678
        %v680 = vsel %vm679, %v677, %v678
        %vm681 = vcmp.eq.s32.totalorder %v621, %v680
        %vm682 = vcmp.eq.s32.totalorder %v622, %v680
        %vm683 = vcmp.eq.s32.totalorder %v623, %v680
        %vm684 = vcmp.eq.s32.totalorder %v624, %v680
        %vm685 = vcmp.eq.s32.totalorder %v625, %v680
        %vm686 = vcmp.eq.s32.totalorder %v626, %v680
        %vm687 = vcmp.eq.s32.totalorder %v627, %v680
        %vm688 = vcmp.eq.s32.totalorder %v628, %v680
        %v689 = vadd.f32 %v641, 1e-08
        %v690 = vrcp.pop %v689
        %v691 = vmul.f32 1.0, %v690
        %v692 = vsel %vm681, 1e+30, %v582
        %v693 = vsel %vm682, 1e+30, %v587
        %v694 = vsel %vm683, 1e+30, %v592
        %v695 = vsel %vm684, 1e+30, %v597
        %v696 = vsel %vm685, 1e+30, %v602
        %v697 = vsel %vm686, 1e+30, %v607
        %v698 = vsel %vm687, 1e+30, %v612
        %v699 = vsel %vm688, 1e+30, %v617
        %v700 = vsel %vm681, %v691, 0.0
        %v701 = vsel %vm682, %v691, 0.0
        %v702 = vsel %vm683, %v691, 0.0
        %v703 = vsel %vm684, %v691, 0.0
        %v704 = vsel %vm685, %v691, 0.0
        %v705 = vsel %vm686, %v691, 0.0
        %v706 = vsel %vm687, %v691, 0.0
        %v707 = vsel %vm688, %v691, 0.0
        %v708 = vadd.f32 %v700, 0.0
        %v709 = vadd.f32 %v701, 0.0
        %v710 = vadd.f32 %v702, 0.0
        %v711 = vadd.f32 %v703, 0.0
        %v712 = vadd.f32 %v704, 0.0
        %v713 = vadd.f32 %v705, 0.0
        %v714 = vadd.f32 %v706, 0.0
        %v715 = vadd.f32 %v707, 0.0
        %v716 = vadd.f32 %v691, 0.0
        %v717 = vmin.f32 %v692, %v696
        %v718 = vmin.f32 %v693, %v697
        %v719 = vmin.f32 %v694, %v698
        %v720 = vmin.f32 %v695, %v699
        %v721 = vmin.f32 %v717, %v718
        %v722 = vmin.f32 %v719, %v720
        %v723 = vmin.f32 %v721, %v722
        %v724 = vrot.slane %v723, 4
        %v725 = vmin.f32 %v723, %v724
        %v726 = vrot.slane %v725, 2
        %v727 = vmin.f32 %v725, %v726
        %v728 = vrot.slane %v727, 1
        %v729 = vmin.f32 %v727, %v728
        %vm730 = vcmp.eq.f32.partialorder %v692, %v729
        %vm731 = vcmp.eq.f32.partialorder %v693, %v729
        %vm732 = vcmp.eq.f32.partialorder %v694, %v729
        %vm733 = vcmp.eq.f32.partialorder %v695, %v729
        %vm734 = vcmp.eq.f32.partialorder %v696, %v729
        %vm735 = vcmp.eq.f32.partialorder %v697, %v729
        %vm736 = vcmp.eq.f32.partialorder %v698, %v729
        %vm737 = vcmp.eq.f32.partialorder %v699, %v729
        %v738 = vsel %vm730, %v621, 64
        %v739 = vsel %vm731, %v622, 64
        %v740 = vsel %vm732, %v623, 64
        %v741 = vsel %vm733, %v624, 64
        %v742 = vsel %vm734, %v625, 64
        %v743 = vsel %vm735, %v626, 64
        %v744 = vsel %vm736, %v627, 64
        %v745 = vsel %vm737, %v628, 64
        %vm746 = vcmp.lt.s32.totalorder %v738, %v742
        %v747 = vsel %vm746, %v738, %v742
        %vm748 = vcmp.lt.s32.totalorder %v739, %v743
        %v749 = vsel %vm748, %v739, %v743
        %vm750 = vcmp.lt.s32.totalorder %v740, %v744
        %v751 = vsel %vm750, %v740, %v744
        %vm752 = vcmp.lt.s32.totalorder %v741, %v745
        %v753 = vsel %vm752, %v741, %v745
        %vm754 = vcmp.lt.s32.totalorder %v747, %v749
        %v755 = vsel %vm754, %v747, %v749
        %vm756 = vcmp.lt.s32.totalorder %v751, %v753
        %v757 = vsel %vm756, %v751, %v753
        %vm758 = vcmp.lt.s32.totalorder %v755, %v757
        %v759 = vsel %vm758, %v755, %v757
        %v760 = vrot.slane %v759, 4
        %vm761 = vcmp.lt.s32.totalorder %v759, %v760
        %v762 = vsel %vm761, %v759, %v760
        %v763 = vrot.slane %v762, 2
        %vm764 = vcmp.lt.s32.totalorder %v762, %v763
        %v765 = vsel %vm764, %v762, %v763
        %v766 = vrot.slane %v765, 1
        %vm767 = vcmp.lt.s32.totalorder %v765, %v766
        %v768 = vsel %vm767, %v765, %v766
        %vm769 = vcmp.eq.s32.totalorder %v621, %v768
        %vm770 = vcmp.eq.s32.totalorder %v622, %v768
        %vm771 = vcmp.eq.s32.totalorder %v623, %v768
        %vm772 = vcmp.eq.s32.totalorder %v624, %v768
        %vm773 = vcmp.eq.s32.totalorder %v625, %v768
        %vm774 = vcmp.eq.s32.totalorder %v626, %v768
        %vm775 = vcmp.eq.s32.totalorder %v627, %v768
        %vm776 = vcmp.eq.s32.totalorder %v628, %v768
        %v777 = vadd.f32 %v729, 1e-08
        %v778 = vrcp.pop %v777
        %v779 = vmul.f32 1.0, %v778
        %v780 = vsel %vm769, 1e+30, %v692
        %v781 = vsel %vm770, 1e+30, %v693
        %v782 = vsel %vm771, 1e+30, %v694
        %v783 = vsel %vm772, 1e+30, %v695
        %v784 = vsel %vm773, 1e+30, %v696
        %v785 = vsel %vm774, 1e+30, %v697
        %v786 = vsel %vm775, 1e+30, %v698
        %v787 = vsel %vm776, 1e+30, %v699
        %v788 = vsel %vm769, %v779, 0.0
        %v789 = vsel %vm770, %v779, 0.0
        %v790 = vsel %vm771, %v779, 0.0
        %v791 = vsel %vm772, %v779, 0.0
        %v792 = vsel %vm773, %v779, 0.0
        %v793 = vsel %vm774, %v779, 0.0
        %v794 = vsel %vm775, %v779, 0.0
        %v795 = vsel %vm776, %v779, 0.0
        %v796 = vadd.f32 %v708, %v788
        %v797 = vadd.f32 %v709, %v789
        %v798 = vadd.f32 %v710, %v790
        %v799 = vadd.f32 %v711, %v791
        %v800 = vadd.f32 %v712, %v792
        %v801 = vadd.f32 %v713, %v793
        %v802 = vadd.f32 %v714, %v794
        %v803 = vadd.f32 %v715, %v795
        %v804 = vadd.f32 %v716, %v779
        %v805 = vmin.f32 %v780, %v784
        %v806 = vmin.f32 %v781, %v785
        %v807 = vmin.f32 %v782, %v786
        %v808 = vmin.f32 %v783, %v787
        %v809 = vmin.f32 %v805, %v806
        %v810 = vmin.f32 %v807, %v808
        %v811 = vmin.f32 %v809, %v810
        %v812 = vrot.slane %v811, 4
        %v813 = vmin.f32 %v811, %v812
        %v814 = vrot.slane %v813, 2
        %v815 = vmin.f32 %v813, %v814
        %v816 = vrot.slane %v815, 1
        %v817 = vmin.f32 %v815, %v816
        %vm818 = vcmp.eq.f32.partialorder %v780, %v817
        %vm819 = vcmp.eq.f32.partialorder %v781, %v817
        %vm820 = vcmp.eq.f32.partialorder %v782, %v817
        %vm821 = vcmp.eq.f32.partialorder %v783, %v817
        %vm822 = vcmp.eq.f32.partialorder %v784, %v817
        %vm823 = vcmp.eq.f32.partialorder %v785, %v817
        %vm824 = vcmp.eq.f32.partialorder %v786, %v817
        %vm825 = vcmp.eq.f32.partialorder %v787, %v817
        %v826 = vsel %vm818, %v621, 64
        %v827 = vsel %vm819, %v622, 64
        %v828 = vsel %vm820, %v623, 64
        %v829 = vsel %vm821, %v624, 64
        %v830 = vsel %vm822, %v625, 64
        %v831 = vsel %vm823, %v626, 64
        %v832 = vsel %vm824, %v627, 64
        %v833 = vsel %vm825, %v628, 64
        %vm834 = vcmp.lt.s32.totalorder %v826, %v830
        %v835 = vsel %vm834, %v826, %v830
        %vm836 = vcmp.lt.s32.totalorder %v827, %v831
        %v837 = vsel %vm836, %v827, %v831
        %vm838 = vcmp.lt.s32.totalorder %v828, %v832
        %v839 = vsel %vm838, %v828, %v832
        %vm840 = vcmp.lt.s32.totalorder %v829, %v833
        %v841 = vsel %vm840, %v829, %v833
        %vm842 = vcmp.lt.s32.totalorder %v835, %v837
        %v843 = vsel %vm842, %v835, %v837
        %vm844 = vcmp.lt.s32.totalorder %v839, %v841
        %v845 = vsel %vm844, %v839, %v841
        %vm846 = vcmp.lt.s32.totalorder %v843, %v845
        %v847 = vsel %vm846, %v843, %v845
        %v848 = vrot.slane %v847, 4
        %vm849 = vcmp.lt.s32.totalorder %v847, %v848
        %v850 = vsel %vm849, %v847, %v848
        %v851 = vrot.slane %v850, 2
        %vm852 = vcmp.lt.s32.totalorder %v850, %v851
        %v853 = vsel %vm852, %v850, %v851
        %v854 = vrot.slane %v853, 1
        %vm855 = vcmp.lt.s32.totalorder %v853, %v854
        %v856 = vsel %vm855, %v853, %v854
        %vm857 = vcmp.eq.s32.totalorder %v621, %v856
        %vm858 = vcmp.eq.s32.totalorder %v622, %v856
        %vm859 = vcmp.eq.s32.totalorder %v623, %v856
        %vm860 = vcmp.eq.s32.totalorder %v624, %v856
        %vm861 = vcmp.eq.s32.totalorder %v625, %v856
        %vm862 = vcmp.eq.s32.totalorder %v626, %v856
        %vm863 = vcmp.eq.s32.totalorder %v627, %v856
        %vm864 = vcmp.eq.s32.totalorder %v628, %v856
        %v865 = vadd.f32 %v817, 1e-08
        %v866 = vrcp.pop %v865
        %v867 = vmul.f32 1.0, %v866
        %v868 = vsel %vm857, %v867, 0.0
        %v869 = vsel %vm858, %v867, 0.0
        %v870 = vsel %vm859, %v867, 0.0
        %v871 = vsel %vm860, %v867, 0.0
        %v872 = vsel %vm861, %v867, 0.0
        %v873 = vsel %vm862, %v867, 0.0
        %v874 = vsel %vm863, %v867, 0.0
        %v875 = vsel %vm864, %v867, 0.0
        %v876 = vadd.f32 %v796, %v868
        %v877 = vadd.f32 %v797, %v869
        %v878 = vadd.f32 %v798, %v870
        %v879 = vadd.f32 %v799, %v871
        %v880 = vadd.f32 %v800, %v872
        %v881 = vadd.f32 %v801, %v873
        %v882 = vadd.f32 %v802, %v874
        %v883 = vadd.f32 %v803, %v875
        %v884 = vadd.f32 %v804, %v867
        %v885 = vrcp.pop %v884
        %v886 = vmul.f32 1.0, %v885
        %v887 = vmul.f32 %v876, %v886
        %v888 = vmul.f32 %v877, %v886
        %v889 = vmul.f32 %v878, %v886
        %v890 = vmul.f32 %v879, %v886
        %v891 = vmul.f32 %v880, %v886
        %v892 = vmul.f32 %v881, %v886
        %v893 = vmul.f32 %v882, %v886
        %v894 = vmul.f32 %v883, %v886
        %vm895 = vcmask 523264
        %v897 = vsel %vm895, %v470, 0
        %v900 = vsel %vm895, %v471, 0
        %v903 = vsel %vm895, %v472, 0
        %v906 = vsel %vm895, %v473, 0
        %908 = vmatprep.subr.mxu0 0.0
        %909 = vmatpush1.msra.mxu0 0.0
        %910 = vmatprep.subr.mxu0 0.0
        %911 = vmatpush1.msra.mxu0 0.0
        %912 = vmatprep.subr.mxu0 0.0
        %913 = vmatpush1.msra.mxu0 0.0
        %914 = vmatprep.subr.mxu0 0.0
        %915 = vmatpush1.msra.mxu0 0.0
        %916 = vmatprep.subr.mxu0 0.0
        %917 = vmatpush1.msra.mxu0 0.0
        %918 = vmatprep.subr.mxu0 0.0
        %919 = vmatpush1.msra.mxu0 0.0
        %920 = vmatprep.subr.mxu0 0.0
        %921 = vmatpush1.msra.mxu0 0.0
        %922 = vmatprep.subr.mxu0 0.0
        %923 = vmatpush1.msra.mxu0 0.0
        %924 = vmatprep.subr.mxu0 0.0
        %925 = vmatpush1.msra.mxu0 %v894
        %926 = vmatprep.subr.mxu0 0.0
        %927 = vmatpush1.msra.mxu0 %v893
        %928 = vmatprep.subr.mxu0 0.0
        %929 = vmatpush1.msra.mxu0 %v892
        %930 = vmatprep.subr.mxu0 0.0
        %931 = vmatpush1.msra.mxu0 %v891
        %932 = vmatprep.subr.mxu0 0.0
        %933 = vmatpush1.msra.mxu0 %v890
        %934 = vmatprep.subr.mxu0 0.0
        %935 = vmatpush1.msra.mxu0 %v889
        %936 = vmatprep.subr.mxu0 0.0
        %937 = vmatpush1.msra.mxu0 %v888
        %938 = vmatprep.subr.mxu0 0.0
        %939 = vmatpush1.msra.mxu0 %v887
        %940 = vmatprep.subr.mxu0 0.0
        %941 = vmatpush2.msra.mxu0 0.0
        %942 = vmatprep.subr.mxu0 0.0
        %943 = vmatpush2.msra.mxu0 0.0
        %944 = vmatprep.subr.mxu0 0.0
        %945 = vmatpush2.msra.mxu0 0.0
        %946 = vmatprep.subr.mxu0 0.0
        %947 = vmatpush2.msra.mxu0 0.0
        %948 = vmatprep.subr.mxu0 0.0
        %949 = vmatpush2.msra.mxu0 0.0
        %950 = vmatprep.subr.mxu0 0.0
        %951 = vmatpush2.msra.mxu0 0.0
        %952 = vmatprep.subr.mxu0 0.0
        %953 = vmatpush2.msra.mxu0 0.0
        %954 = vmatprep.subr.mxu0 0.0
        %955 = vmatpush2.msra.mxu0 0.0
        %956 = vmatprep.subr.mxu0 0.0
        %957 = vmatpush2.msra.mxu0 0.0
        %958 = vmatprep.subr.mxu0 0.0
        %959 = vmatpush2.msra.mxu0 0.0
        %960 = vmatprep.subr.mxu0 0.0
        %961 = vmatpush2.msra.mxu0 0.0
        %962 = vmatprep.subr.mxu0 0.0
        %963 = vmatpush2.msra.mxu0 0.0
        %964 = vmatprep.subr.mxu0 0.0
        %965 = vmatpush2.msra.mxu0 0.0
        %966 = vmatprep.subr.mxu0 0.0
        %967 = vmatpush2.msra.mxu0 0.0
        %968 = vmatprep.subr.mxu0 0.0
        %969 = vmatpush2.msra.mxu0 0.0
        %970 = vmatprep.subr.mxu0 0.0
        %971 = vmatpush2.msra.mxu0 0.0
        %972 = vmatprep.mubr.f32.mxu0 0.0
        %973 = vmatmul.mubr.f32.gmra.mxu0 %v897
        %v974 = vpop.f32.mrf.mxu0
        %v975 = vadd.f32 0.0, %v974
        %v976 = vpop.f32.mrf.mxu0
        %977 = vmatprep.mubr.f32.mxu0 0.0
        %978 = vmatmul.mubr.f32.gmra.mxu0 %v900
        %v979 = vpop.f32.mrf.mxu0
        %v980 = vadd.f32 0.0, %v979
        %v981 = vpop.f32.mrf.mxu0
        %982 = vmatprep.mubr.f32.mxu0 0.0
        %983 = vmatmul.mubr.f32.gmra.mxu0 %v903
        %v984 = vpop.f32.mrf.mxu0
        %v985 = vadd.f32 0.0, %v984
        %v986 = vpop.f32.mrf.mxu0
        %987 = vmatprep.mubr.f32.mxu0 0.0
        %988 = vmatmul.mubr.f32.gmra.mxu0 %v906
        %v989 = vpop.f32.mrf.mxu0
        %v990 = vadd.f32 0.0, %v989
        %v991 = vpop.f32.mrf.mxu0
        %992 = vdwg.mxu0
        %v993 = vld [vmem:[%s4] sm:$0xff]
        %v994 = vld [vmem:[%s4 + $0x8] sm:$0xff]
        %v995 = vld [vmem:[%s4 + $0x10] sm:$0xff]
        %v996 = vld [vmem:[%s4 + $0x18] sm:$0xff]
        %v997 = vld [vmem:[%s4 + $0x20] sm:$0xff]
        %v998 = vld [vmem:[%s4 + $0x28] sm:$0xff]
        %v999 = vld [vmem:[%s4 + $0x30] sm:$0xff]
        %v1000 = vld [vmem:[%s4 + $0x38] sm:$0xff]
        %v1001 = vld [vmem:[%s5] sm:$0xff]
        %v1002 = vld [vmem:[%s5 + $0x8] sm:$0xff]
        %v1003 = vld [vmem:[%s5 + $0x10] sm:$0xff]
        %v1004 = vld [vmem:[%s5 + $0x18] sm:$0xff]
        %v1005 = vld [vmem:[%s5 + $0x20] sm:$0xff]
        %v1006 = vld [vmem:[%s5 + $0x28] sm:$0xff]
        %v1007 = vld [vmem:[%s5 + $0x30] sm:$0xff]
        %v1008 = vld [vmem:[%s5 + $0x38] sm:$0xff]
        %v1009 = vld [vmem:[%s6] sm:$0xff]
        %v1010 = vld [vmem:[%s6 + $0x8] sm:$0xff]
        %v1011 = vld [vmem:[%s6 + $0x10] sm:$0xff]
        %v1012 = vld [vmem:[%s6 + $0x18] sm:$0xff]
        %v1013 = vld [vmem:[%s6 + $0x20] sm:$0xff]
        %v1014 = vld [vmem:[%s6 + $0x28] sm:$0xff]
        %v1015 = vld [vmem:[%s6 + $0x30] sm:$0xff]
        %v1016 = vld [vmem:[%s6 + $0x38] sm:$0xff]
        %vm1017 = vcmask 130048
        %v1019 = vsel %vm1017, %v993, 0
        %v1022 = vsel %vm1017, %v994, 0
        %v1025 = vsel %vm1017, %v995, 0
        %v1028 = vsel %vm1017, %v996, 0
        %v1031 = vsel %vm1017, %v997, 0
        %v1034 = vsel %vm1017, %v998, 0
        %v1037 = vsel %vm1017, %v999, 0
        %v1040 = vsel %vm1017, %v1000, 0
        %1042 = vmatprep.subr.mxu0 0.0
        %1043 = vmatpush1.msra.mxu0 0.0
        %1044 = vmatprep.subr.mxu0 0.0
        %1045 = vmatpush1.msra.mxu0 0.0
        %1046 = vmatprep.subr.mxu0 0.0
        %1047 = vmatpush1.msra.mxu0 0.0
        %1048 = vmatprep.subr.mxu0 0.0
        %1049 = vmatpush1.msra.mxu0 0.0
        %1050 = vmatprep.subr.mxu0 0.0
        %1051 = vmatpush1.msra.mxu0 0.0
        %1052 = vmatprep.subr.mxu0 0.0
        %1053 = vmatpush1.msra.mxu0 0.0
        %1054 = vmatprep.subr.mxu0 0.0
        %1055 = vmatpush1.msra.mxu0 0.0
        %1056 = vmatprep.subr.mxu0 0.0
        %1057 = vmatpush1.msra.mxu0 0.0
        %1058 = vmatprep.subr.mxu0 0.0
        %1059 = vmatpush1.msra.mxu0 0.0
        %1060 = vmatprep.subr.mxu0 0.0
        %1061 = vmatpush1.msra.mxu0 0.0
        %1062 = vmatprep.subr.mxu0 0.0
        %1063 = vmatpush1.msra.mxu0 0.0
        %1064 = vmatprep.subr.mxu0 0.0
        %1065 = vmatpush1.msra.mxu0 0.0
        %1066 = vmatprep.subr.mxu0 0.0
        %1067 = vmatpush1.msra.mxu0 0.0
        %1068 = vmatprep.subr.mxu0 0.0
        %1069 = vmatpush1.msra.mxu0 0.0
        %1070 = vmatprep.subr.mxu0 0.0
        %1071 = vmatpush1.msra.mxu0 %v469
        %1072 = vmatprep.subr.mxu0 0.0
        %1073 = vmatpush1.msra.mxu0 %v468
        %1074 = vmatprep.subr.mxu0 0.0
        %1075 = vmatpush2.msra.mxu0 0.0
        %1076 = vmatprep.subr.mxu0 0.0
        %1077 = vmatpush2.msra.mxu0 0.0
        %1078 = vmatprep.subr.mxu0 0.0
        %1079 = vmatpush2.msra.mxu0 0.0
        %1080 = vmatprep.subr.mxu0 0.0
        %1081 = vmatpush2.msra.mxu0 0.0
        %1082 = vmatprep.subr.mxu0 0.0
        %1083 = vmatpush2.msra.mxu0 0.0
        %1084 = vmatprep.subr.mxu0 0.0
        %1085 = vmatpush2.msra.mxu0 0.0
        %1086 = vmatprep.subr.mxu0 0.0
        %1087 = vmatpush2.msra.mxu0 0.0
        %1088 = vmatprep.subr.mxu0 0.0
        %1089 = vmatpush2.msra.mxu0 0.0
        %1090 = vmatprep.subr.mxu0 0.0
        %1091 = vmatpush2.msra.mxu0 0.0
        %1092 = vmatprep.subr.mxu0 0.0
        %1093 = vmatpush2.msra.mxu0 0.0
        %1094 = vmatprep.subr.mxu0 0.0
        %1095 = vmatpush2.msra.mxu0 0.0
        %1096 = vmatprep.subr.mxu0 0.0
        %1097 = vmatpush2.msra.mxu0 0.0
        %1098 = vmatprep.subr.mxu0 0.0
        %1099 = vmatpush2.msra.mxu0 0.0
        %1100 = vmatprep.subr.mxu0 0.0
        %1101 = vmatpush2.msra.mxu0 0.0
        %1102 = vmatprep.subr.mxu0 0.0
        %1103 = vmatpush2.msra.mxu0 0.0
        %1104 = vmatprep.subr.mxu0 0.0
        %1105 = vmatpush2.msra.mxu0 0.0
        %1106 = vmatprep.mubr.f32.mxu0 0.0
        %1107 = vmatmul.mubr.f32.gmra.mxu0 %v1019
        %v1108 = vpop.f32.mrf.mxu0
        %v1109 = vadd.f32 0.0, %v1108
        %v1110 = vpop.f32.mrf.mxu0
        %1111 = vmatprep.mubr.f32.mxu0 0.0
        %1112 = vmatmul.mubr.f32.gmra.mxu0 %v1022
        %v1113 = vpop.f32.mrf.mxu0
        %v1114 = vadd.f32 0.0, %v1113
        %v1115 = vpop.f32.mrf.mxu0
        %1116 = vmatprep.mubr.f32.mxu0 0.0
        %1117 = vmatmul.mubr.f32.gmra.mxu0 %v1025
        %v1118 = vpop.f32.mrf.mxu0
        %v1119 = vadd.f32 0.0, %v1118
        %v1120 = vpop.f32.mrf.mxu0
        %1121 = vmatprep.mubr.f32.mxu0 0.0
        %1122 = vmatmul.mubr.f32.gmra.mxu0 %v1028
        %v1123 = vpop.f32.mrf.mxu0
        %v1124 = vadd.f32 0.0, %v1123
        %v1125 = vpop.f32.mrf.mxu0
        %1126 = vmatprep.mubr.f32.mxu0 0.0
        %1127 = vmatmul.mubr.f32.gmra.mxu0 %v1031
        %v1128 = vpop.f32.mrf.mxu0
        %v1129 = vadd.f32 0.0, %v1128
        %v1130 = vpop.f32.mrf.mxu0
        %1131 = vmatprep.mubr.f32.mxu0 0.0
        %1132 = vmatmul.mubr.f32.gmra.mxu0 %v1034
        %v1133 = vpop.f32.mrf.mxu0
        %v1134 = vadd.f32 0.0, %v1133
        %v1135 = vpop.f32.mrf.mxu0
        %1136 = vmatprep.mubr.f32.mxu0 0.0
        %1137 = vmatmul.mubr.f32.gmra.mxu0 %v1037
        %v1138 = vpop.f32.mrf.mxu0
        %v1139 = vadd.f32 0.0, %v1138
        %v1140 = vpop.f32.mrf.mxu0
        %1141 = vmatprep.mubr.f32.mxu0 0.0
        %1142 = vmatmul.mubr.f32.gmra.mxu0 %v1040
        %v1143 = vpop.f32.mrf.mxu0
        %v1144 = vadd.f32 0.0, %v1143
        %v1145 = vpop.f32.mrf.mxu0
        %1146 = vdwg.mxu0
        %vm1147 = vcmask 261120
        %v1149 = vsel %vm1147, %v1001, 0
        %v1152 = vsel %vm1147, %v1002, 0
        %v1155 = vsel %vm1147, %v1003, 0
        %v1158 = vsel %vm1147, %v1004, 0
        %v1161 = vsel %vm1147, %v1005, 0
        %v1164 = vsel %vm1147, %v1006, 0
        %v1167 = vsel %vm1147, %v1007, 0
        %v1170 = vsel %vm1147, %v1008, 0
        %1172 = vmatprep.subr.mxu0 0.0
        %1173 = vmatpush1.msra.mxu0 0.0
        %1174 = vmatprep.subr.mxu0 0.0
        %1175 = vmatpush1.msra.mxu0 0.0
        %1176 = vmatprep.subr.mxu0 0.0
        %1177 = vmatpush1.msra.mxu0 0.0
        %1178 = vmatprep.subr.mxu0 0.0
        %1179 = vmatpush1.msra.mxu0 0.0
        %1180 = vmatprep.subr.mxu0 0.0
        %1181 = vmatpush1.msra.mxu0 0.0
        %1182 = vmatprep.subr.mxu0 0.0
        %1183 = vmatpush1.msra.mxu0 0.0
        %1184 = vmatprep.subr.mxu0 0.0
        %1185 = vmatpush1.msra.mxu0 0.0
        %1186 = vmatprep.subr.mxu0 0.0
        %1187 = vmatpush1.msra.mxu0 0.0
        %1188 = vmatprep.subr.mxu0 0.0
        %1189 = vmatpush1.msra.mxu0 0.0
        %1190 = vmatprep.subr.mxu0 0.0
        %1191 = vmatpush1.msra.mxu0 0.0
        %1192 = vmatprep.subr.mxu0 0.0
        %1193 = vmatpush1.msra.mxu0 0.0
        %1194 = vmatprep.subr.mxu0 0.0
        %1195 = vmatpush1.msra.mxu0 0.0
        %1196 = vmatprep.subr.mxu0 0.0
        %1197 = vmatpush1.msra.mxu0 %v990
        %1198 = vmatprep.subr.mxu0 0.0
        %1199 = vmatpush1.msra.mxu0 %v985
        %1200 = vmatprep.subr.mxu0 0.0
        %1201 = vmatpush1.msra.mxu0 %v980
        %1202 = vmatprep.subr.mxu0 0.0
        %1203 = vmatpush1.msra.mxu0 %v975
        %1204 = vmatprep.subr.mxu0 0.0
        %1205 = vmatpush2.msra.mxu0 0.0
        %1206 = vmatprep.subr.mxu0 0.0
        %1207 = vmatpush2.msra.mxu0 0.0
        %1208 = vmatprep.subr.mxu0 0.0
        %1209 = vmatpush2.msra.mxu0 0.0
        %1210 = vmatprep.subr.mxu0 0.0
        %1211 = vmatpush2.msra.mxu0 0.0
        %1212 = vmatprep.subr.mxu0 0.0
        %1213 = vmatpush2.msra.mxu0 0.0
        %1214 = vmatprep.subr.mxu0 0.0
        %1215 = vmatpush2.msra.mxu0 0.0
        %1216 = vmatprep.subr.mxu0 0.0
        %1217 = vmatpush2.msra.mxu0 0.0
        %1218 = vmatprep.subr.mxu0 0.0
        %1219 = vmatpush2.msra.mxu0 0.0
        %1220 = vmatprep.subr.mxu0 0.0
        %1221 = vmatpush2.msra.mxu0 0.0
        %1222 = vmatprep.subr.mxu0 0.0
        %1223 = vmatpush2.msra.mxu0 0.0
        %1224 = vmatprep.subr.mxu0 0.0
        %1225 = vmatpush2.msra.mxu0 0.0
        %1226 = vmatprep.subr.mxu0 0.0
        %1227 = vmatpush2.msra.mxu0 0.0
        %1228 = vmatprep.subr.mxu0 0.0
        %1229 = vmatpush2.msra.mxu0 0.0
        %1230 = vmatprep.subr.mxu0 0.0
        %1231 = vmatpush2.msra.mxu0 0.0
        %1232 = vmatprep.subr.mxu0 0.0
        %1233 = vmatpush2.msra.mxu0 0.0
        %1234 = vmatprep.subr.mxu0 0.0
        %1235 = vmatpush2.msra.mxu0 0.0
        %1236 = vmatprep.mubr.f32.mxu0 0.0
        %1237 = vmatmul.mubr.f32.gmra.mxu0 %v1149
        %v1238 = vpop.f32.mrf.mxu0
        %v1239 = vadd.f32 %v1109, %v1238
        %v1240 = vpop.f32.mrf.mxu0
        %1241 = vmatprep.mubr.f32.mxu0 0.0
        %1242 = vmatmul.mubr.f32.gmra.mxu0 %v1152
        %v1243 = vpop.f32.mrf.mxu0
        %v1244 = vadd.f32 %v1114, %v1243
        %v1245 = vpop.f32.mrf.mxu0
        %1246 = vmatprep.mubr.f32.mxu0 0.0
        %1247 = vmatmul.mubr.f32.gmra.mxu0 %v1155
        %v1248 = vpop.f32.mrf.mxu0
        %v1249 = vadd.f32 %v1119, %v1248
        %v1250 = vpop.f32.mrf.mxu0
        %1251 = vmatprep.mubr.f32.mxu0 0.0
        %1252 = vmatmul.mubr.f32.gmra.mxu0 %v1158
        %v1253 = vpop.f32.mrf.mxu0
        %v1254 = vadd.f32 %v1124, %v1253
        %v1255 = vpop.f32.mrf.mxu0
        %1256 = vmatprep.mubr.f32.mxu0 0.0
        %1257 = vmatmul.mubr.f32.gmra.mxu0 %v1161
        %v1258 = vpop.f32.mrf.mxu0
        %v1259 = vadd.f32 %v1129, %v1258
        %v1260 = vpop.f32.mrf.mxu0
        %1261 = vmatprep.mubr.f32.mxu0 0.0
        %1262 = vmatmul.mubr.f32.gmra.mxu0 %v1164
        %v1263 = vpop.f32.mrf.mxu0
        %v1264 = vadd.f32 %v1134, %v1263
        %v1265 = vpop.f32.mrf.mxu0
        %1266 = vmatprep.mubr.f32.mxu0 0.0
        %1267 = vmatmul.mubr.f32.gmra.mxu0 %v1167
        %v1268 = vpop.f32.mrf.mxu0
        %v1269 = vadd.f32 %v1139, %v1268
        %v1270 = vpop.f32.mrf.mxu0
        %1271 = vmatprep.mubr.f32.mxu0 0.0
        %1272 = vmatmul.mubr.f32.gmra.mxu0 %v1170
        %v1273 = vpop.f32.mrf.mxu0
        %v1274 = vadd.f32 %v1144, %v1273
        %v1275 = vpop.f32.mrf.mxu0
        %1276 = vdwg.mxu0
        %1278 = vset.pattern.permute.xlu0 0
        %1279 = vperm.xlu0 %1278, %v1009
        %v1280 = vpop.permute.xlu0 %1279
        %1283 = vset.pattern.permute.xlu0 0
        %1284 = vperm.xlu0 %1283, %v1010
        %v1285 = vpop.permute.xlu0 %1284
        %1288 = vset.pattern.permute.xlu0 0
        %1289 = vperm.xlu0 %1288, %v1011
        %v1290 = vpop.permute.xlu0 %1289
        %1293 = vset.pattern.permute.xlu0 0
        %1294 = vperm.xlu0 %1293, %v1012
        %v1295 = vpop.permute.xlu0 %1294
        %1298 = vset.pattern.permute.xlu0 0
        %1299 = vperm.xlu0 %1298, %v1013
        %v1300 = vpop.permute.xlu0 %1299
        %1303 = vset.pattern.permute.xlu0 0
        %1304 = vperm.xlu0 %1303, %v1014
        %v1305 = vpop.permute.xlu0 %1304
        %1308 = vset.pattern.permute.xlu0 0
        %1309 = vperm.xlu0 %1308, %v1015
        %v1310 = vpop.permute.xlu0 %1309
        %1313 = vset.pattern.permute.xlu0 0
        %1314 = vperm.xlu0 %1313, %v1016
        %v1315 = vpop.permute.xlu0 %1314
        %v1317 = vadd.f32 %v1239, %v1280
        %v1318 = vadd.f32 %v1244, %v1285
        %v1319 = vadd.f32 %v1249, %v1290
        %v1320 = vadd.f32 %v1254, %v1295
        %v1321 = vadd.f32 %v1259, %v1300
        %v1322 = vadd.f32 %v1264, %v1305
        %v1323 = vadd.f32 %v1269, %v1310
        %v1324 = vadd.f32 %v1274, %v1315
        %v1325 = vmax.f32 %v1317, 0.0
        %v1326 = vmax.f32 %v1318, 0.0
        %v1327 = vmax.f32 %v1319, 0.0
        %v1328 = vmax.f32 %v1320, 0.0
        %v1329 = vmax.f32 %v1321, 0.0
        %v1330 = vmax.f32 %v1322, 0.0
        %v1331 = vmax.f32 %v1323, 0.0
        %v1332 = vmax.f32 %v1324, 0.0
        %v1333 = vld [vmem:[%s7] sm:$0xff]
        %v1334 = vld [vmem:[%s7 + $0x8] sm:$0xff]
        %v1335 = vld [vmem:[%s7 + $0x10] sm:$0xff]
        %v1336 = vld [vmem:[%s7 + $0x18] sm:$0xff]
        %v1337 = vld [vmem:[%s8] sm:$0xff]
        %v1338 = vld [vmem:[%s8 + $0x8] sm:$0xff]
        %v1339 = vld [vmem:[%s8 + $0x10] sm:$0xff]
        %v1340 = vld [vmem:[%s8 + $0x18] sm:$0xff]
        %1342 = vset.pattern.permute.xlu0 0
        %1343 = vperm.xlu0 %1342, %v1337
        %v1344 = vpop.permute.xlu0 %1343
        %1347 = vset.pattern.permute.xlu0 0
        %1348 = vperm.xlu0 %1347, %v1338
        %v1349 = vpop.permute.xlu0 %1348
        %1352 = vset.pattern.permute.xlu0 0
        %1353 = vperm.xlu0 %1352, %v1339
        %v1354 = vpop.permute.xlu0 %1353
        %1357 = vset.pattern.permute.xlu0 0
        %1358 = vperm.xlu0 %1357, %v1340
        %v1359 = vpop.permute.xlu0 %1358
        %v1362 = vsel %vm895, %v1333, 0
        %v1365 = vsel %vm895, %v1334, 0
        %v1368 = vsel %vm895, %v1335, 0
        %v1371 = vsel %vm895, %v1336, 0
        %1373 = vmatprep.subr.mxu0 0.0
        %1374 = vmatpush1.msra.mxu0 0.0
        %1375 = vmatprep.subr.mxu0 0.0
        %1376 = vmatpush1.msra.mxu0 0.0
        %1377 = vmatprep.subr.mxu0 0.0
        %1378 = vmatpush1.msra.mxu0 0.0
        %1379 = vmatprep.subr.mxu0 0.0
        %1380 = vmatpush1.msra.mxu0 0.0
        %1381 = vmatprep.subr.mxu0 0.0
        %1382 = vmatpush1.msra.mxu0 0.0
        %1383 = vmatprep.subr.mxu0 0.0
        %1384 = vmatpush1.msra.mxu0 0.0
        %1385 = vmatprep.subr.mxu0 0.0
        %1386 = vmatpush1.msra.mxu0 0.0
        %1387 = vmatprep.subr.mxu0 0.0
        %1388 = vmatpush1.msra.mxu0 0.0
        %1389 = vmatprep.subr.mxu0 0.0
        %1390 = vmatpush1.msra.mxu0 %v1332
        %1391 = vmatprep.subr.mxu0 0.0
        %1392 = vmatpush1.msra.mxu0 %v1331
        %1393 = vmatprep.subr.mxu0 0.0
        %1394 = vmatpush1.msra.mxu0 %v1330
        %1395 = vmatprep.subr.mxu0 0.0
        %1396 = vmatpush1.msra.mxu0 %v1329
        %1397 = vmatprep.subr.mxu0 0.0
        %1398 = vmatpush1.msra.mxu0 %v1328
        %1399 = vmatprep.subr.mxu0 0.0
        %1400 = vmatpush1.msra.mxu0 %v1327
        %1401 = vmatprep.subr.mxu0 0.0
        %1402 = vmatpush1.msra.mxu0 %v1326
        %1403 = vmatprep.subr.mxu0 0.0
        %1404 = vmatpush1.msra.mxu0 %v1325
        %1405 = vmatprep.subr.mxu0 0.0
        %1406 = vmatpush2.msra.mxu0 0.0
        %1407 = vmatprep.subr.mxu0 0.0
        %1408 = vmatpush2.msra.mxu0 0.0
        %1409 = vmatprep.subr.mxu0 0.0
        %1410 = vmatpush2.msra.mxu0 0.0
        %1411 = vmatprep.subr.mxu0 0.0
        %1412 = vmatpush2.msra.mxu0 0.0
        %1413 = vmatprep.subr.mxu0 0.0
        %1414 = vmatpush2.msra.mxu0 0.0
        %1415 = vmatprep.subr.mxu0 0.0
        %1416 = vmatpush2.msra.mxu0 0.0
        %1417 = vmatprep.subr.mxu0 0.0
        %1418 = vmatpush2.msra.mxu0 0.0
        %1419 = vmatprep.subr.mxu0 0.0
        %1420 = vmatpush2.msra.mxu0 0.0
        %1421 = vmatprep.subr.mxu0 0.0
        %1422 = vmatpush2.msra.mxu0 0.0
        %1423 = vmatprep.subr.mxu0 0.0
        %1424 = vmatpush2.msra.mxu0 0.0
        %1425 = vmatprep.subr.mxu0 0.0
        %1426 = vmatpush2.msra.mxu0 0.0
        %1427 = vmatprep.subr.mxu0 0.0
        %1428 = vmatpush2.msra.mxu0 0.0
        %1429 = vmatprep.subr.mxu0 0.0
        %1430 = vmatpush2.msra.mxu0 0.0
        %1431 = vmatprep.subr.mxu0 0.0
        %1432 = vmatpush2.msra.mxu0 0.0
        %1433 = vmatprep.subr.mxu0 0.0
        %1434 = vmatpush2.msra.mxu0 0.0
        %1435 = vmatprep.subr.mxu0 0.0
        %1436 = vmatpush2.msra.mxu0 0.0
        %1437 = vmatprep.mubr.f32.mxu0 0.0
        %1438 = vmatmul.mubr.f32.gmra.mxu0 %v1362
        %v1439 = vpop.f32.mrf.mxu0
        %v1440 = vadd.f32 %v1344, %v1439
        %v1441 = vpop.f32.mrf.mxu0
        %1442 = vmatprep.mubr.f32.mxu0 0.0
        %1443 = vmatmul.mubr.f32.gmra.mxu0 %v1365
        %v1444 = vpop.f32.mrf.mxu0
        %v1445 = vadd.f32 %v1349, %v1444
        %v1446 = vpop.f32.mrf.mxu0
        %1447 = vmatprep.mubr.f32.mxu0 0.0
        %1448 = vmatmul.mubr.f32.gmra.mxu0 %v1368
        %v1449 = vpop.f32.mrf.mxu0
        %v1450 = vadd.f32 %v1354, %v1449
        %v1451 = vpop.f32.mrf.mxu0
        %1452 = vmatprep.mubr.f32.mxu0 0.0
        %1453 = vmatmul.mubr.f32.gmra.mxu0 %v1371
        %v1454 = vpop.f32.mrf.mxu0
        %v1455 = vadd.f32 %v1359, %v1454
        %v1456 = vpop.f32.mrf.mxu0
        %1457 = vdwg.mxu0
        %v1458 = vmax.f32 %v1440, 0.0
        %v1459 = vmax.f32 %v1445, 0.0
        %v1460 = vmax.f32 %v1450, 0.0
        %v1461 = vmax.f32 %v1455, 0.0
        %1462 = vst [vmem:[%s440] sm:$0xff] %v1458
        %1463 = vst [vmem:[%s440 + $0x8] sm:$0xff] %v1459
        %1464 = vst [vmem:[%s440 + $0x10] sm:$0xff] %v1460
        %1465 = vst [vmem:[%s440 + $0x18] sm:$0xff] %v1461
        %s1466 = sand.u32 %s258, 1
        %s1467 = scalar_lea.sflag [#allocation5], %s1466
        %s1468 = sand.u32 %s258, 1
        %s1469 = smul.addr %s1468, 32
        %s1470 = scalar_lea.vmem [#allocation4], %s1469
        // Predicated region
        $region95: #{tpu_custom_call.1} parent=89 // pred_check
          %p1471 = pneg %p268
        $region96: #{tpu_custom_call.1} parent=89 // pred_check_branch
          %1473 = sbr.rel (%p1471) target = $region98
        $region97: #{tpu_custom_call.1} parent=89 // pred_region
          %s1475 = ssub.s32 512, 512
          %1476 = vsyncadd %s1467, %s1475
          %s1477 = smul.addr %s27, 8
          %s1478 = sadd.s32 %s28, %s1477
          %s1479 = smul.addr %s1478, 128
          %s1480 = scalar_lea.hbm %s9, %s1479
          %s1481 = sshll.u32 %s1470, 4
          %s1482 = int_to_ptr.vmem [resolvable:$true] %s1481
          %1487 = dma.vmem_to_hbm [thread:$0]  %s1482, 512, %s1480, %s1467, 128, 256, 8
        $region98: #{tpu_custom_call.1} parent=89 // pred_fallthru
          _
      $region90: #{tpu_custom_call.1} parent=5 // pred_fallthru
        _
      %p1488 = scmp.le.s32.totalorder 2, %s18
      // Predicated region
      $region99: #{tpu_custom_call.1} parent=5 // pred_check
        %p1489 = pneg %p1488
      $region100: #{tpu_custom_call.1} parent=5 // pred_check_branch
        %1491 = sbr.rel (%p1489) target = $region102
      $region101: #{tpu_custom_call.1} parent=5 // pred_region
        %s1492 = ssub.s32 %s18, 2
        // Predicated region
        $region103: #{tpu_custom_call.1} parent=101 // pred_check
          %p1493 = pneg %p274
        $region104: #{tpu_custom_call.1} parent=101 // pred_check_branch
          %1495 = sbr.rel (%p1493) target = $region106
        $region105: #{tpu_custom_call.1} parent=101 // pred_region
          %s1496 = sand.u32 %s259, 1
          %s1497 = scalar_lea.sflag [#allocation5], %s1496
          %s1498 = sand.u32 %s259, 1
          %s1499 = smul.addr %s1498, 32
          %s1500 = scalar_lea.vmem [#allocation4], %s1499
          %1501 = dma.done %s1497, 512
        $region106: #{tpu_custom_call.1} parent=101 // pred_fallthru
          _
      $region102: #{tpu_custom_call.1} parent=5 // pred_fallthru
        _
    $region6: #{tpu_custom_call.1} parent=1 // loop_footer
      %s22 = sadd.s32 1, %s18
    $region7: #{tpu_custom_call.1} parent=1 // loop_footer_branch
      %17 = sbr.rel target = $region3
    $region8: #{tpu_custom_call.1} parent=1 // loop_exit
      _
    %1502 = vsyncpa [#allocation5], 1
    %s1503 = scalar_lea.sflag [#allocation5], 1
    %1504 = vsyncpa %s1503, 1

</llo_original>
